<compile_context>
chip_gen: v7x
topology: tpu7x:2x2x1
jax: 0.10.0
libtpu: 0.0.40
codegen_flags: <defaults>
</compile_context>

<pallas_src>
import jax
import jax.numpy as jnp
from jax import lax
from jax.experimental import pallas as pl
from jax.experimental.pallas import tpu as pltpu

EPS = 1e-5
K = 5          # conv kernel size
PAD = 2        # conv padding (each side)
STRIDE = 2     # conv stride
C_IN = 24
C1, C2, C3 = 32, 64, 128
NUM_CLASSES = 55
LANE = 128     # lane-dense padded logits width


def _conv_out_len(l):
    return (l + 2 * PAD - K) // STRIDE + 1


# ------------------------------ fused kernel --------------------------------

def _convnet_kernel(x_ref, w1_ref, w2_ref, w3_ref,
                    sh1_ref, sh2_ref, sh3_ref,
                    wl_ref, bl_ref, pool_ref, m1_ref, m2_ref,
                    o_ref, h2_sc, h3_sc):
    m1 = m1_ref.shape[0]
    m2 = m2_ref.shape[0]
    m3 = pool_ref.shape[1]

    # Only element 0's two left-pad rows need explicit zeroing; every other
    # row of the staged scratches is fully overwritten below each step.
    h2_sc[pl.ds(0, PAD), :] = jnp.zeros((PAD, h2_sc.shape[1]), jnp.float32)
    h3_sc[pl.ds(0, PAD), :] = jnp.zeros((PAD, h3_sc.shape[1]), jnp.float32)

    def conv_bn_relu(src_ref, w_ref, sh_ref, m_out):
        # im2col via K stride-2 sublane reads, then ONE MXU matmul
        # (contraction = K*Cin: 120 / 160 / 320).
        taps = [src_ref[pl.ds(k, m_out, stride=STRIDE), :] for k in range(K)]
        cols = jnp.concatenate(taps, axis=1)                    # (m_out, K*Cin)
        y = jnp.dot(cols, w_ref[...], preferred_element_type=jnp.float32)
        return jnp.maximum(y + sh_ref[...], 0.0)                # BN shift + ReLU

    # conv1: read taps directly from the input block (B*S1, C_IN); zero the
    # invalid ("garbage") rows via the constant mask, store shifted by PAD
    # rows so each element's chunk gets its left zero-padding for conv2.
    y1 = conv_bn_relu(x_ref, w1_ref, sh1_ref, m1) * m1_ref[...]
    h2_sc[pl.ds(PAD, m1), :] = y1

    y2 = conv_bn_relu(h2_sc, w2_ref, sh2_ref, m2) * m2_ref[...]
    h3_sc[pl.ds(PAD, m2), :] = y2

    y3 = conv_bn_relu(h3_sc, w3_ref, sh3_ref, m3)               # (m3, C3)

    # AdaptiveAvgPool1d(1) as a constant segment-mean matmul, then the Linear
    # (padded to 128 output lanes for a lane-dense store).
    pooled = jnp.dot(pool_ref[...], y3, preferred_element_type=jnp.float32)
    logits = jnp.dot(pooled, wl_ref[...],
                     preferred_element_type=jnp.float32) + bl_ref[...]
    o_ref[...] = logits                                         # (B, 128)


# ------------------------------ parameter prep ------------------------------

def bn_scale_shift(gamma, beta, running_mean, running_var):
    scale = gamma / jnp.sqrt(running_var + EPS)
    shift = beta - running_mean * scale
    return scale, shift


def _fold_conv_bn_im2col(w_ock, gamma, beta, rmean, rvar):
    """PyTorch conv weight (Cout, Cin, K) -> im2col weight (K*Cin, Cout) with
    the BN (eval) scale folded in; returns (w_im2col, shift[1, Cout])."""
    scale, shift = bn_scale_shift(gamma, beta, rmean, rvar)
    w_taps = jnp.transpose(w_ock, (2, 1, 0)) * scale[None, None, :]  # (K,Cin,Cout)
    kcin = w_taps.shape[0] * w_taps.shape[1]
    return (w_taps.reshape(kcin, -1).astype(jnp.float32),
            shift.reshape(1, -1).astype(jnp.float32))


def init_params(key):
    ks = jax.random.split(key, 17)
    it = iter(ks)
    p = {}
    p["w1"] = 0.1 * jax.random.normal(next(it), (C1, C_IN, K), jnp.float32)
    p["w2"] = 0.1 * jax.random.normal(next(it), (C2, C1, K), jnp.float32)
    p["w3"] = 0.1 * jax.random.normal(next(it), (C3, C2, K), jnp.float32)
    for i, c in zip((1, 2, 3), (C1, C2, C3)):
        gamma = 1.0 + 0.1 * jax.random.normal(next(it), (c,), jnp.float32)
        beta = 0.1 * jax.random.normal(next(it), (c,), jnp.float32)
        rmean = 0.05 * jax.random.normal(next(it), (c,), jnp.float32)
        rvar = jnp.abs(0.1 * jax.random.normal(next(it), (c,), jnp.float32)) + 1.0
        p[f"bn{i}"] = (gamma, beta, rmean, rvar)
    p["w_lin"] = 0.1 * jax.random.normal(next(it), (C3, NUM_CLASSES), jnp.float32)
    p["b_lin"] = 0.1 * jax.random.normal(next(it), (NUM_CLASSES,), jnp.float32)
    return p


# --------------------------------- forward ----------------------------------

def convnet_forward(params, x_ncl, block_b=None):
    n, c_in, l0 = x_ncl.shape
    assert c_in == C_IN

    lout1 = _conv_out_len(l0)
    lout2 = _conv_out_len(lout1)
    lout3 = _conv_out_len(lout2)
    assert lout3 >= 1

    # Per-element staged chunk lengths s1 -> s1/2 -> s1/4, chosen so every
    # layer's zero-pad rows live inside its own chunk and s1/4 stays even.
    need = max(l0 + 2 * PAD,
               2 * (lout1 + 2 * PAD),
               4 * (lout2 + 2 * PAD),
               8 * (lout3 + PAD))
    s1 = 8 * ((need + 7) // 8)
    s2, s3 = s1 // 2, s1 // 4
    assert s2 >= lout1 + 2 * PAD and s3 >= lout2 + 2 * PAD
    assert s3 % 2 == 0 and (s3 // 2) >= lout3 + PAD

    # Batch block: multiple of 8 (sublane-aligned output block), capped at 32,
    # aiming for >=2 grid steps so both TCs get work on multi-core chips.
    if block_b is None:
        block_b = 8 * max(1, min(4, (n + 15) // 16))
    n_pad = block_b * ((n + block_b - 1) // block_b)
    num_steps = n_pad // block_b

    # Rows produced per layer per step (kept 2 short so the K=5 stride-2 tap
    # reads never run past the B*S-row slab; the store offset of PAD rows then
    # exactly fills the next staged scratch).
    m1 = block_b * s2 - 2
    m2 = block_b * s3 - 2
    m3 = block_b * (s3 // 2) - 2

    # ---- constants / weights (trace-time; resident full-array blocks) ------
    w1, sh1 = _fold_conv_bn_im2col(params["w1"], *params["bn1"])
    w2, sh2 = _fold_conv_bn_im2col(params["w2"], *params["bn2"])
    w3, sh3 = _fold_conv_bn_im2col(params["w3"], *params["bn3"])

    wl = jnp.zeros((C3, LANE), jnp.float32).at[:, :NUM_CLASSES].set(
        params["w_lin"].astype(jnp.float32))
    bl = jnp.zeros((1, LANE), jnp.float32).at[:, :NUM_CLASSES].set(
        params["b_lin"].astype(jnp.float32))

    # Row-validity masks (zero the garbage rows before they become the next
    # layer's zero padding).
    r1 = jnp.arange(m1, dtype=jnp.int32)
    mask1 = ((r1 % s2) < lout1).astype(jnp.float32).reshape(m1, 1)
    r2 = jnp.arange(m2, dtype=jnp.int32)
    mask2 = ((r2 % s3) < lout2).astype(jnp.float32).reshape(m2, 1)

    # Segment-mean selection matrix for AdaptiveAvgPool1d(1): (B, m3).
    rb = jnp.arange(block_b, dtype=jnp.int32)[:, None]
    rc = jnp.arange(m3, dtype=jnp.int32)[None, :]
    pool_sel = ((rc // (s3 // 2)) == rb) & ((rc % (s3 // 2)) < lout3)
    pool_sel = pool_sel.astype(jnp.float32) / float(lout3)

    # ---- input staging: NCL -> per-element chunk [0,0, x_0..x_{L-1}, 0...] --
    x = jnp.transpose(x_ncl, (0, 2, 1)).astype(jnp.float32)       # (N, L, C)
    x = jnp.pad(x, ((0, n_pad - n), (PAD, s1 - l0 - PAD), (0, 0)))
    x = x.reshape(n_pad * s1, C_IN)                               # flat slab

    def full_spec(a):
        nd = a.ndim
        return pl.BlockSpec(a.shape, lambda i, _nd=nd: (0,) * _nd)

    out = pl.pallas_call(
        _convnet_kernel,
        out_shape=jax.ShapeDtypeStruct((n_pad, LANE), jnp.float32),
        grid=(num_steps,),
        in_specs=[
            pl.BlockSpec((block_b * s1, C_IN), lambda i: (i, 0)),  # B elements
            full_spec(w1), full_spec(w2), full_spec(w3),
            full_spec(sh1), full_spec(sh2), full_spec(sh3),
            full_spec(wl), full_spec(bl),
            full_spec(pool_sel), full_spec(mask1), full_spec(mask2),
        ],
        out_specs=pl.BlockSpec((block_b, LANE), lambda i: (i, 0)),
        scratch_shapes=[
            pltpu.VMEM((block_b * s2, C1), jnp.float32),           # staged h1
            pltpu.VMEM((block_b * s3, C2), jnp.float32),           # staged h2
        ],
        compiler_params=pltpu.CompilerParams(
            dimension_semantics=("parallel",)),
    )(x, w1, w2, w3, sh1, sh2, sh3, wl, bl, pool_sel, mask1, mask2)

    return out[:n, :NUM_CLASSES]


# ------------------------------ pure-JAX reference --------------------------

def _ref_conv_bn_relu(x_ncl, w, gamma, beta, rmean, rvar):
    scale, shift = bn_scale_shift(gamma, beta, rmean, rvar)
    y = lax.conv_general_dilated(
        x_ncl, w, window_strides=(STRIDE,), padding=((PAD, PAD),),
        dimension_numbers=("NCH", "OIH", "NCH"))
    y = y * scale[None, :, None] + shift[None, :, None]
    return jnp.maximum(y, 0.0)


def convnet_reference(params, x_ncl):
    h = _ref_conv_bn_relu(x_ncl.astype(jnp.float32), params["w1"], *params["bn1"])
    h = _ref_conv_bn_relu(h, params["w2"], *params["bn2"])
    h = _ref_conv_bn_relu(h, params["w3"], *params["bn3"])
    pooled = jnp.mean(h, axis=-1)                 # AdaptiveAvgPool1d(1) + Flatten
    return pooled @ params["w_lin"] + params["b_lin"]


# ----------------------------------- main ------------------------------------

if __name__ == "__main__":
    key = jax.random.PRNGKey(0)
    k_param, k_x = jax.random.split(key)
    params = init_params(k_param)

    # Small input consistent with the module: (batch=2, channels=24, length=16).
    x = jax.random.normal(k_x, (2, C_IN, 16), jnp.float32)

    out = jax.block_until_ready(jax.jit(convnet_forward)(params, x))
    assert out.shape == (2, NUM_CLASSES), out.shape

    ref = convnet_reference(params, x)
    max_err = float(jnp.max(jnp.abs(out - ref)))
    assert jnp.allclose(out, ref, atol=1e-3, rtol=1e-3), max_err

    print("KERNEL_OK")
</pallas_src>

<mosaic_0001>
module attributes {stable_mosaic.version = 11 : i64} {
  func.func @_convnet_kernel(%arg0: i32, %arg1: memref<256x24xf32, #tpu.memory_space<vmem>>, %arg2: memref<120x32xf32, #tpu.memory_space<vmem>>, %arg3: memref<160x64xf32, #tpu.memory_space<vmem>>, %arg4: memref<320x128xf32, #tpu.memory_space<vmem>>, %arg5: memref<1x32xf32, #tpu.memory_space<vmem>>, %arg6: memref<1x64xf32, #tpu.memory_space<vmem>>, %arg7: memref<1x128xf32, #tpu.memory_space<vmem>>, %arg8: memref<128x128xf32, #tpu.memory_space<vmem>>, %arg9: memref<1x128xf32, #tpu.memory_space<vmem>>, %arg10: memref<8x30xf32, #tpu.memory_space<vmem>>, %arg11: memref<126x1xf32, #tpu.memory_space<vmem>>, %arg12: memref<62x1xf32, #tpu.memory_space<vmem>>, %arg13: memref<8x128xf32, #tpu.memory_space<vmem>>, %arg14: memref<128x32xf32, #tpu.memory_space<vmem>>, %arg15: memref<64x64xf32, #tpu.memory_space<vmem>>) attributes {dimension_semantics = [#tpu.dimension_semantics<parallel>], iteration_bounds = array<i64: 1>, scalar_prefetch = 0 : i64, scratch_operands = 2 : i64, tpu.core_type = #tpu.core_type<tc>, window_params = [{transform_indices = @transform_0, window_bounds = array<i64: 256, 24>}, {pipeline_mode = #tpu.pipeline_mode<synchronous>, transform_indices = @transform_1, window_bounds = array<i64: 120, 32>}, {pipeline_mode = #tpu.pipeline_mode<synchronous>, transform_indices = @transform_2, window_bounds = array<i64: 160, 64>}, {pipeline_mode = #tpu.pipeline_mode<synchronous>, transform_indices = @transform_3, window_bounds = array<i64: 320, 128>}, {pipeline_mode = #tpu.pipeline_mode<synchronous>, transform_indices = @transform_4, window_bounds = array<i64: 1, 32>}, {pipeline_mode = #tpu.pipeline_mode<synchronous>, transform_indices = @transform_5, window_bounds = array<i64: 1, 64>}, {pipeline_mode = #tpu.pipeline_mode<synchronous>, transform_indices = @transform_6, window_bounds = array<i64: 1, 128>}, {pipeline_mode = #tpu.pipeline_mode<synchronous>, transform_indices = @transform_7, window_bounds = array<i64: 128, 128>}, {pipeline_mode = #tpu.pipeline_mode<synchronous>, transform_indices = @transform_8, window_bounds = array<i64: 1, 128>}, {pipeline_mode = #tpu.pipeline_mode<synchronous>, transform_indices = @transform_9, window_bounds = array<i64: 8, 30>}, {pipeline_mode = #tpu.pipeline_mode<synchronous>, transform_indices = @transform_10, window_bounds = array<i64: 126, 1>}, {pipeline_mode = #tpu.pipeline_mode<synchronous>, transform_indices = @transform_11, window_bounds = array<i64: 62, 1>}, {transform_indices = @transform_12, window_bounds = array<i64: 8, 128>}]} {
    %cst = arith.constant 0.000000e+00 : f32
    %0 = vector.broadcast %cst : f32 to vector<2x32xf32>
    %c0 = arith.constant 0 : index
    %c0_0 = arith.constant 0 : index
    %1 = vector.load %arg14[%c0, %c0_0] : memref<128x32xf32, #tpu.memory_space<vmem>>, vector<2x32xf32>
    tpu.vector_store %arg14[%c0, %c0_0], %0 {strides = array<i32>} : memref<128x32xf32, #tpu.memory_space<vmem>>, vector<2x32xf32>,
    %cst_1 = arith.constant 0.000000e+00 : f32
    %2 = vector.broadcast %cst_1 : f32 to vector<2x64xf32>
    %c0_2 = arith.constant 0 : index
    %c0_3 = arith.constant 0 : index
    %3 = vector.load %arg15[%c0_2, %c0_3] : memref<64x64xf32, #tpu.memory_space<vmem>>, vector<2x64xf32>
    tpu.vector_store %arg15[%c0_2, %c0_3], %2 {strides = array<i32>} : memref<64x64xf32, #tpu.memory_space<vmem>>, vector<2x64xf32>,
    %c0_4 = arith.constant 0 : index
    %c0_5 = arith.constant 0 : index
    %4 = tpu.strided_load %arg1[%c0_4, %c0_5] {strides = array<i32: 2, 1>} : memref<256x24xf32, #tpu.memory_space<vmem>>, vector<126x24xf32>
    %c1 = arith.constant 1 : index
    %c0_6 = arith.constant 0 : index
    %5 = tpu.strided_load %arg1[%c1, %c0_6] {strides = array<i32: 2, 1>} : memref<256x24xf32, #tpu.memory_space<vmem>>, vector<126x24xf32>
    %c2 = arith.constant 2 : index
    %c0_7 = arith.constant 0 : index
    %6 = tpu.strided_load %arg1[%c2, %c0_7] {strides = array<i32: 2, 1>} : memref<256x24xf32, #tpu.memory_space<vmem>>, vector<126x24xf32>
    %c3 = arith.constant 3 : index
    %c0_8 = arith.constant 0 : index
    %7 = tpu.strided_load %arg1[%c3, %c0_8] {strides = array<i32: 2, 1>} : memref<256x24xf32, #tpu.memory_space<vmem>>, vector<126x24xf32>
    %c4 = arith.constant 4 : index
    %c0_9 = arith.constant 0 : index
    %8 = tpu.strided_load %arg1[%c4, %c0_9] {strides = array<i32: 2, 1>} : memref<256x24xf32, #tpu.memory_space<vmem>>, vector<126x24xf32>
    %9 = tpu.concatenate %4, %5, %6, %7, %8 in 1 : vector<126x24xf32>, vector<126x24xf32>, vector<126x24xf32>, vector<126x24xf32>, vector<126x24xf32> -> vector<126x120xf32>
    %c0_10 = arith.constant 0 : index
    %c0_11 = arith.constant 0 : index
    %10 = vector.load %arg2[%c0_10, %c0_11] : memref<120x32xf32, #tpu.memory_space<vmem>>, vector<120x32xf32>
    %cst_12 = arith.constant dense<0.000000e+00> : vector<126x32xf32>
    %11 = tpu.matmul %9, %10, %cst_12 {dimension_numbers = #tpu.dot_dimension_numbers<[1], [0], [0], [1], [0, 0, 1, 1], [], []>} : vector<126x120xf32>, vector<120x32xf32>, vector<126x32xf32> -> vector<126x32xf32>
    %c0_13 = arith.constant 0 : index
    %c0_14 = arith.constant 0 : index
    %12 = vector.load %arg5[%c0_13, %c0_14] : memref<1x32xf32, #tpu.memory_space<vmem>>, vector<1x32xf32>
    %13 = vector.broadcast %12 : vector<1x32xf32> to vector<126x32xf32>
    %14 = arith.addf %11, %13 : vector<126x32xf32>
    %cst_15 = arith.constant 0.000000e+00 : f32
    %15 = vector.broadcast %cst_15 : f32 to vector<126x32xf32>
    %16 = arith.maximumf %14, %15 : vector<126x32xf32>
    %c0_16 = arith.constant 0 : index
    %c0_17 = arith.constant 0 : index
    %17 = vector.load %arg11[%c0_16, %c0_17] : memref<126x1xf32, #tpu.memory_space<vmem>>, vector<126x1xf32>
    %18 = vector.broadcast %17 : vector<126x1xf32> to vector<126x32xf32>
    %19 = arith.mulf %16, %18 : vector<126x32xf32>
    %c2_18 = arith.constant 2 : index
    %c0_19 = arith.constant 0 : index
    %20 = vector.load %arg14[%c2_18, %c0_19] : memref<128x32xf32, #tpu.memory_space<vmem>>, vector<126x32xf32>
    tpu.vector_store %arg14[%c2_18, %c0_19], %19 {strides = array<i32>} : memref<128x32xf32, #tpu.memory_space<vmem>>, vector<126x32xf32>,
    %c0_20 = arith.constant 0 : index
    %c0_21 = arith.constant 0 : index
    %21 = tpu.strided_load %arg14[%c0_20, %c0_21] {strides = array<i32: 2, 1>} : memref<128x32xf32, #tpu.memory_space<vmem>>, vector<62x32xf32>
    %c1_22 = arith.constant 1 : index
    %c0_23 = arith.constant 0 : index
    %22 = tpu.strided_load %arg14[%c1_22, %c0_23] {strides = array<i32: 2, 1>} : memref<128x32xf32, #tpu.memory_space<vmem>>, vector<62x32xf32>
    %c2_24 = arith.constant 2 : index
    %c0_25 = arith.constant 0 : index
    %23 = tpu.strided_load %arg14[%c2_24, %c0_25] {strides = array<i32: 2, 1>} : memref<128x32xf32, #tpu.memory_space<vmem>>, vector<62x32xf32>
    %c3_26 = arith.constant 3 : index
    %c0_27 = arith.constant 0 : index
    %24 = tpu.strided_load %arg14[%c3_26, %c0_27] {strides = array<i32: 2, 1>} : memref<128x32xf32, #tpu.memory_space<vmem>>, vector<62x32xf32>
    %c4_28 = arith.constant 4 : index
    %c0_29 = arith.constant 0 : index
    %25 = tpu.strided_load %arg14[%c4_28, %c0_29] {strides = array<i32: 2, 1>} : memref<128x32xf32, #tpu.memory_space<vmem>>, vector<62x32xf32>
    %26 = tpu.concatenate %21, %22, %23, %24, %25 in 1 : vector<62x32xf32>, vector<62x32xf32>, vector<62x32xf32>, vector<62x32xf32>, vector<62x32xf32> -> vector<62x160xf32>
    %c0_30 = arith.constant 0 : index
    %c0_31 = arith.constant 0 : index
    %27 = vector.load %arg3[%c0_30, %c0_31] : memref<160x64xf32, #tpu.memory_space<vmem>>, vector<160x64xf32>
    %cst_32 = arith.constant dense<0.000000e+00> : vector<62x64xf32>
    %28 = tpu.matmul %26, %27, %cst_32 {dimension_numbers = #tpu.dot_dimension_numbers<[1], [0], [0], [1], [0, 0, 1, 1], [], []>} : vector<62x160xf32>, vector<160x64xf32>, vector<62x64xf32> -> vector<62x64xf32>
    %c0_33 = arith.constant 0 : index
    %c0_34 = arith.constant 0 : index
    %29 = vector.load %arg6[%c0_33, %c0_34] : memref<1x64xf32, #tpu.memory_space<vmem>>, vector<1x64xf32>
    %30 = vector.broadcast %29 : vector<1x64xf32> to vector<62x64xf32>
    %31 = arith.addf %28, %30 : vector<62x64xf32>
    %cst_35 = arith.constant 0.000000e+00 : f32
    %32 = vector.broadcast %cst_35 : f32 to vector<62x64xf32>
    %33 = arith.maximumf %31, %32 : vector<62x64xf32>
    %c0_36 = arith.constant 0 : index
    %c0_37 = arith.constant 0 : index
    %34 = vector.load %arg12[%c0_36, %c0_37] : memref<62x1xf32, #tpu.memory_space<vmem>>, vector<62x1xf32>
    %35 = vector.broadcast %34 : vector<62x1xf32> to vector<62x64xf32>
    %36 = arith.mulf %33, %35 : vector<62x64xf32>
    %c2_38 = arith.constant 2 : index
    %c0_39 = arith.constant 0 : index
    %37 = vector.load %arg15[%c2_38, %c0_39] : memref<64x64xf32, #tpu.memory_space<vmem>>, vector<62x64xf32>
    tpu.vector_store %arg15[%c2_38, %c0_39], %36 {strides = array<i32>} : memref<64x64xf32, #tpu.memory_space<vmem>>, vector<62x64xf32>,
    %c0_40 = arith.constant 0 : index
    %c0_41 = arith.constant 0 : index
    %38 = tpu.strided_load %arg15[%c0_40, %c0_41] {strides = array<i32: 2, 1>} : memref<64x64xf32, #tpu.memory_space<vmem>>, vector<30x64xf32>
    %c1_42 = arith.constant 1 : index
    %c0_43 = arith.constant 0 : index
    %39 = tpu.strided_load %arg15[%c1_42, %c0_43] {strides = array<i32: 2, 1>} : memref<64x64xf32, #tpu.memory_space<vmem>>, vector<30x64xf32>
    %c2_44 = arith.constant 2 : index
    %c0_45 = arith.constant 0 : index
    %40 = tpu.strided_load %arg15[%c2_44, %c0_45] {strides = array<i32: 2, 1>} : memref<64x64xf32, #tpu.memory_space<vmem>>, vector<30x64xf32>
    %c3_46 = arith.constant 3 : index
    %c0_47 = arith.constant 0 : index
    %41 = tpu.strided_load %arg15[%c3_46, %c0_47] {strides = array<i32: 2, 1>} : memref<64x64xf32, #tpu.memory_space<vmem>>, vector<30x64xf32>
    %c4_48 = arith.constant 4 : index
    %c0_49 = arith.constant 0 : index
    %42 = tpu.strided_load %arg15[%c4_48, %c0_49] {strides = array<i32: 2, 1>} : memref<64x64xf32, #tpu.memory_space<vmem>>, vector<30x64xf32>
    %43 = tpu.concatenate %38, %39, %40, %41, %42 in 1 : vector<30x64xf32>, vector<30x64xf32>, vector<30x64xf32>, vector<30x64xf32>, vector<30x64xf32> -> vector<30x320xf32>
    %c0_50 = arith.constant 0 : index
    %c0_51 = arith.constant 0 : index
    %44 = vector.load %arg4[%c0_50, %c0_51] : memref<320x128xf32, #tpu.memory_space<vmem>>, vector<320x128xf32>
    %cst_52 = arith.constant dense<0.000000e+00> : vector<30x128xf32>
    %45 = tpu.matmul %43, %44, %cst_52 {dimension_numbers = #tpu.dot_dimension_numbers<[1], [0], [0], [1], [0, 0, 1, 1], [], []>} : vector<30x320xf32>, vector<320x128xf32>, vector<30x128xf32> -> vector<30x128xf32>
    %c0_53 = arith.constant 0 : index
    %c0_54 = arith.constant 0 : index
    %46 = vector.load %arg7[%c0_53, %c0_54] : memref<1x128xf32, #tpu.memory_space<vmem>>, vector<1x128xf32>
    %47 = vector.broadcast %46 : vector<1x128xf32> to vector<30x128xf32>
    %48 = arith.addf %45, %47 : vector<30x128xf32>
    %cst_55 = arith.constant 0.000000e+00 : f32
    %49 = vector.broadcast %cst_55 : f32 to vector<30x128xf32>
    %50 = arith.maximumf %48, %49 : vector<30x128xf32>
    %c0_56 = arith.constant 0 : index
    %c0_57 = arith.constant 0 : index
    %51 = vector.load %arg10[%c0_56, %c0_57] : memref<8x30xf32, #tpu.memory_space<vmem>>, vector<8x30xf32>
    %cst_58 = arith.constant dense<0.000000e+00> : vector<8x128xf32>
    %52 = tpu.matmul %51, %50, %cst_58 {dimension_numbers = #tpu.dot_dimension_numbers<[1], [0], [0], [1], [0, 0, 1, 1], [], []>} : vector<8x30xf32>, vector<30x128xf32>, vector<8x128xf32> -> vector<8x128xf32>
    %c0_59 = arith.constant 0 : index
    %c0_60 = arith.constant 0 : index
    %53 = vector.load %arg8[%c0_59, %c0_60] : memref<128x128xf32, #tpu.memory_space<vmem>>, vector<128x128xf32>
    %cst_61 = arith.constant dense<0.000000e+00> : vector<8x128xf32>
    %54 = tpu.matmul %52, %53, %cst_61 {dimension_numbers = #tpu.dot_dimension_numbers<[1], [0], [0], [1], [0, 0, 1, 1], [], []>} : vector<8x128xf32>, vector<128x128xf32>, vector<8x128xf32> -> vector<8x128xf32>
    %c0_62 = arith.constant 0 : index
    %c0_63 = arith.constant 0 : index
    %55 = vector.load %arg9[%c0_62, %c0_63] : memref<1x128xf32, #tpu.memory_space<vmem>>, vector<1x128xf32>
    %56 = vector.broadcast %55 : vector<1x128xf32> to vector<8x128xf32>
    %57 = arith.addf %54, %56 : vector<8x128xf32>
    %c0_64 = arith.constant 0 : index
    %c0_65 = arith.constant 0 : index
    %58 = vector.load %arg13[%c0_64, %c0_65] : memref<8x128xf32, #tpu.memory_space<vmem>>, vector<8x128xf32>
    tpu.vector_store %arg13[%c0_64, %c0_65], %57 {strides = array<i32>} : memref<8x128xf32, #tpu.memory_space<vmem>>, vector<8x128xf32>,
    return
  }
  func.func @transform_0(%arg0: i32) -> (i32, i32) {
    %c0_i32 = arith.constant 0 : i32
    %c0_i32_0 = arith.constant 0 : i32
    return %arg0, %c0_i32 : i32, i32
  }
  func.func @transform_1(%arg0: i32) -> (i32, i32) {
    %c0_i32 = arith.constant 0 : i32
    %c0_i32_0 = arith.constant 0 : i32
    %c0_i32_1 = arith.constant 0 : i32
    return %c0_i32, %c0_i32_0 : i32, i32
  }
  func.func @transform_2(%arg0: i32) -> (i32, i32) {
    %c0_i32 = arith.constant 0 : i32
    %c0_i32_0 = arith.constant 0 : i32
    %c0_i32_1 = arith.constant 0 : i32
    return %c0_i32, %c0_i32_0 : i32, i32
  }
  func.func @transform_3(%arg0: i32) -> (i32, i32) {
    %c0_i32 = arith.constant 0 : i32
    %c0_i32_0 = arith.constant 0 : i32
    %c0_i32_1 = arith.constant 0 : i32
    return %c0_i32, %c0_i32_0 : i32, i32
  }
  func.func @transform_4(%arg0: i32) -> (i32, i32) {
    %c0_i32 = arith.constant 0 : i32
    %c0_i32_0 = arith.constant 0 : i32
    %c0_i32_1 = arith.constant 0 : i32
    return %c0_i32, %c0_i32_0 : i32, i32
  }
  func.func @transform_5(%arg0: i32) -> (i32, i32) {
    %c0_i32 = arith.constant 0 : i32
    %c0_i32_0 = arith.constant 0 : i32
    %c0_i32_1 = arith.constant 0 : i32
    return %c0_i32, %c0_i32_0 : i32, i32
  }
  func.func @transform_6(%arg0: i32) -> (i32, i32) {
    %c0_i32 = arith.constant 0 : i32
    %c0_i32_0 = arith.constant 0 : i32
    %c0_i32_1 = arith.constant 0 : i32
    return %c0_i32, %c0_i32_0 : i32, i32
  }
  func.func @transform_7(%arg0: i32) -> (i32, i32) {
    %c0_i32 = arith.constant 0 : i32
    %c0_i32_0 = arith.constant 0 : i32
    %c0_i32_1 = arith.constant 0 : i32
    return %c0_i32, %c0_i32_0 : i32, i32
  }
  func.func @transform_8(%arg0: i32) -> (i32, i32) {
    %c0_i32 = arith.constant 0 : i32
    %c0_i32_0 = arith.constant 0 : i32
    %c0_i32_1 = arith.constant 0 : i32
    return %c0_i32, %c0_i32_0 : i32, i32
  }
  func.func @transform_9(%arg0: i32) -> (i32, i32) {
    %c0_i32 = arith.constant 0 : i32
    %c0_i32_0 = arith.constant 0 : i32
    %c0_i32_1 = arith.constant 0 : i32
    return %c0_i32, %c0_i32_0 : i32, i32
  }
  func.func @transform_10(%arg0: i32) -> (i32, i32) {
    %c0_i32 = arith.constant 0 : i32
    %c0_i32_0 = arith.constant 0 : i32
    %c0_i32_1 = arith.constant 0 : i32
    return %c0_i32, %c0_i32_0 : i32, i32
  }
  func.func @transform_11(%arg0: i32) -> (i32, i32) {
    %c0_i32 = arith.constant 0 : i32
    %c0_i32_0 = arith.constant 0 : i32
    %c0_i32_1 = arith.constant 0 : i32
    return %c0_i32, %c0_i32_0 : i32, i32
  }
  func.func @transform_12(%arg0: i32) -> (i32, i32) {
    %c0_i32 = arith.constant 0 : i32
    %c0_i32_0 = arith.constant 0 : i32
    return %arg0, %c0_i32 : i32, i32
  }
}

</mosaic_0001>

<llo_original>
// kernel: convnet_forward.1
$region0: #{convnet_forward.1}
  #allocation0 [shape = 'u32[]', space=smem, size = 0x4, offset = 0x4, fixed_abs, tag = 'smem constant byte address 0x4 - core index']
  #allocation1 [shape = 'u32[144,128]{1,0:T(1,128)}', space=vmem, size = 0x12000, scoped, tag = 'internal scratch']
  #allocation2 [shape = 'f32[128,32]{1,0:T(8,128)}', space=vmem, size = 0x10000, scoped, tag = 'scratch operand']
  #allocation3 [shape = 'f32[64,64]{1,0:T(8,128)}', space=vmem, size = 0x8000, scoped, tag = 'scratch operand']
  %s0 = inlined_call_operand.vmem [shape: f32[256,24], index: 0, kind: input, shape index: {}]
  %s1 = inlined_call_operand.vmem [shape: f32[120,32], index: 1, kind: input, shape index: {}]
  %s2 = inlined_call_operand.vmem [shape: f32[160,64], index: 2, kind: input, shape index: {}]
  %s3 = inlined_call_operand.vmem [shape: f32[320,128], index: 3, kind: input, shape index: {}]
  %s4 = inlined_call_operand.vmem [shape: f32[1,32], index: 4, kind: input, shape index: {}]
  %s5 = inlined_call_operand.vmem [shape: f32[1,64], index: 5, kind: input, shape index: {}]
  %s6 = inlined_call_operand.vmem [shape: f32[1,128], index: 6, kind: input, shape index: {}]
  %s7 = inlined_call_operand.vmem [shape: f32[128,128], index: 7, kind: input, shape index: {}]
  %s8 = inlined_call_operand.vmem [shape: f32[1,128], index: 8, kind: input, shape index: {}]
  %s9 = inlined_call_operand.vmem [shape: f32[8,30], index: 9, kind: input, shape index: {}]
  %s10 = inlined_call_operand.vmem [shape: f32[126,1], index: 10, kind: input, shape index: {}]
  %s11 = inlined_call_operand.vmem [shape: f32[62,1], index: 11, kind: input, shape index: {}]
  %s12 = inlined_call_operand.vmem [shape: f32[8,128], index: 12, kind: output, shape index: {}]
  %s13 = sld [smem:[#allocation0]]
  $region58: #{convnet_forward.1} parent=0
    _
  %s15 = ssub.s32 1, %s13
  %s16 = scalar_select 0, %s15, %s13
  // Predicated region
  $region2: #{convnet_forward.1} parent=0 // pred_check
    _
  $region3: #{convnet_forward.1} parent=0 // pred_check_branch
    %18 = sbr.rel (0) target = $region5
  $region4: #{convnet_forward.1} parent=0 // pred_region
    _
  $region5: #{convnet_forward.1} parent=0 // pred_fallthru
    _
  // Predicated region
  $region6: #{convnet_forward.1} parent=0 // pred_check
    _
  $region7: #{convnet_forward.1} parent=0 // pred_check_branch
    %20 = sbr.rel (0) target = $region9
  $region8: #{convnet_forward.1} parent=0 // pred_region
    _
  $region9: #{convnet_forward.1} parent=0 // pred_fallthru
    _
  // Predicated region
  $region10: #{convnet_forward.1} parent=0 // pred_check
    _
  $region11: #{convnet_forward.1} parent=0 // pred_check_branch
    %22 = sbr.rel (0) target = $region13
  $region12: #{convnet_forward.1} parent=0 // pred_region
    _
  $region13: #{convnet_forward.1} parent=0 // pred_fallthru
    _
  // Predicated region
  $region14: #{convnet_forward.1} parent=0 // pred_check
    _
  $region15: #{convnet_forward.1} parent=0 // pred_check_branch
    %24 = sbr.rel (0) target = $region17
  $region16: #{convnet_forward.1} parent=0 // pred_region
    _
  $region17: #{convnet_forward.1} parent=0 // pred_fallthru
    _
  // Predicated region
  $region18: #{convnet_forward.1} parent=0 // pred_check
    _
  $region19: #{convnet_forward.1} parent=0 // pred_check_branch
    %26 = sbr.rel (0) target = $region21
  $region20: #{convnet_forward.1} parent=0 // pred_region
    _
  $region21: #{convnet_forward.1} parent=0 // pred_fallthru
    _
  // Predicated region
  $region22: #{convnet_forward.1} parent=0 // pred_check
    _
  $region23: #{convnet_forward.1} parent=0 // pred_check_branch
    %28 = sbr.rel (0) target = $region25
  $region24: #{convnet_forward.1} parent=0 // pred_region
    _
  $region25: #{convnet_forward.1} parent=0 // pred_fallthru
    _
  // Predicated region
  $region26: #{convnet_forward.1} parent=0 // pred_check
    _
  $region27: #{convnet_forward.1} parent=0 // pred_check_branch
    %30 = sbr.rel (0) target = $region29
  $region28: #{convnet_forward.1} parent=0 // pred_region
    _
  $region29: #{convnet_forward.1} parent=0 // pred_fallthru
    _
  // Predicated region
  $region30: #{convnet_forward.1} parent=0 // pred_check
    _
  $region31: #{convnet_forward.1} parent=0 // pred_check_branch
    %32 = sbr.rel (0) target = $region33
  $region32: #{convnet_forward.1} parent=0 // pred_region
    _
  $region33: #{convnet_forward.1} parent=0 // pred_fallthru
    _
  // Predicated region
  $region34: #{convnet_forward.1} parent=0 // pred_check
    _
  $region35: #{convnet_forward.1} parent=0 // pred_check_branch
    %34 = sbr.rel (0) target = $region37
  $region36: #{convnet_forward.1} parent=0 // pred_region
    _
  $region37: #{convnet_forward.1} parent=0 // pred_fallthru
    _
  // Predicated region
  $region38: #{convnet_forward.1} parent=0 // pred_check
    _
  $region39: #{convnet_forward.1} parent=0 // pred_check_branch
    %36 = sbr.rel (0) target = $region41
  $region40: #{convnet_forward.1} parent=0 // pred_region
    _
  $region41: #{convnet_forward.1} parent=0 // pred_fallthru
    _
  // Predicated region
  $region42: #{convnet_forward.1} parent=0 // pred_check
    _
  $region43: #{convnet_forward.1} parent=0 // pred_check_branch
    %38 = sbr.rel (0) target = $region45
  $region44: #{convnet_forward.1} parent=0 // pred_region
    _
  $region45: #{convnet_forward.1} parent=0 // pred_fallthru
    _
  // Predicated region
  $region46: #{convnet_forward.1} parent=0 // pred_check
    _
  $region47: #{convnet_forward.1} parent=0 // pred_check_branch
    %40 = sbr.rel (0) target = $region49
  $region48: #{convnet_forward.1} parent=0 // pred_region
    _
  $region49: #{convnet_forward.1} parent=0 // pred_fallthru
    _
  %vm41 = vcmask 254976
  %42 = vst.msk [vmem:[#allocation2] sm:$0x3] %vm41, 0.0
  %vm43 = vcmask 517120
  %44 = vst.msk [vmem:[#allocation3] sm:$0x3] %vm43, 0.0
  %v45 = vld [vmem:[%s0] ss:$2 sm:$0xff]
  %s46 = scalar_lea.vmem %s0, 16
  %v47 = vld [vmem:[%s46] ss:$2 sm:$0xff]
  %s48 = scalar_lea.vmem %s0, 32
  %v49 = vld [vmem:[%s48] ss:$2 sm:$0xff]
  %s50 = scalar_lea.vmem %s0, 48
  %v51 = vld [vmem:[%s50] ss:$2 sm:$0xff]
  %s52 = scalar_lea.vmem %s0, 64
  %v53 = vld [vmem:[%s52] ss:$2 sm:$0xff]
  %s54 = scalar_lea.vmem %s0, 80
  %v55 = vld [vmem:[%s54] ss:$2 sm:$0xff]
  %s56 = scalar_lea.vmem %s0, 96
  %v57 = vld [vmem:[%s56] ss:$2 sm:$0xff]
  %s58 = scalar_lea.vmem %s0, 112
  %v59 = vld [vmem:[%s58] ss:$2 sm:$0xff]
  %s60 = scalar_lea.vmem %s0, 128
  %v61 = vld [vmem:[%s60] ss:$2 sm:$0xff]
  %s62 = scalar_lea.vmem %s0, 144
  %v63 = vld [vmem:[%s62] ss:$2 sm:$0xff]
  %s64 = scalar_lea.vmem %s0, 160
  %v65 = vld [vmem:[%s64] ss:$2 sm:$0xff]
  %s66 = scalar_lea.vmem %s0, 176
  %v67 = vld [vmem:[%s66] ss:$2 sm:$0xff]
  %s68 = scalar_lea.vmem %s0, 192
  %v69 = vld [vmem:[%s68] ss:$2 sm:$0xff]
  %s70 = scalar_lea.vmem %s0, 208
  %v71 = vld [vmem:[%s70] ss:$2 sm:$0xff]
  %s72 = scalar_lea.vmem %s0, 224
  %v73 = vld [vmem:[%s72] ss:$2 sm:$0xff]
  %s74 = scalar_lea.vmem %s0, 240
  %v75 = vld [vmem:[%s74] ss:$2 sm:$0x3f]
  %s76 = scalar_lea.vmem %s0, 1
  %v77 = vld [vmem:[%s76] ss:$2 sm:$0xff]
  %s78 = scalar_lea.vmem %s0, 17
  %v79 = vld [vmem:[%s78] ss:$2 sm:$0xff]
  %s80 = scalar_lea.vmem %s0, 33
  %v81 = vld [vmem:[%s80] ss:$2 sm:$0xff]
  %s82 = scalar_lea.vmem %s0, 49
  %v83 = vld [vmem:[%s82] ss:$2 sm:$0xff]
  %s84 = scalar_lea.vmem %s0, 65
  %v85 = vld [vmem:[%s84] ss:$2 sm:$0xff]
  %s86 = scalar_lea.vmem %s0, 81
  %v87 = vld [vmem:[%s86] ss:$2 sm:$0xff]
  %s88 = scalar_lea.vmem %s0, 97
  %v89 = vld [vmem:[%s88] ss:$2 sm:$0xff]
  %s90 = scalar_lea.vmem %s0, 113
  %v91 = vld [vmem:[%s90] ss:$2 sm:$0xff]
  %s92 = scalar_lea.vmem %s0, 129
  %v93 = vld [vmem:[%s92] ss:$2 sm:$0xff]
  %s94 = scalar_lea.vmem %s0, 145
  %v95 = vld [vmem:[%s94] ss:$2 sm:$0xff]
  %s96 = scalar_lea.vmem %s0, 161
  %v97 = vld [vmem:[%s96] ss:$2 sm:$0xff]
  %s98 = scalar_lea.vmem %s0, 177
  %v99 = vld [vmem:[%s98] ss:$2 sm:$0xff]
  %s100 = scalar_lea.vmem %s0, 193
  %v101 = vld [vmem:[%s100] ss:$2 sm:$0xff]
  %s102 = scalar_lea.vmem %s0, 209
  %v103 = vld [vmem:[%s102] ss:$2 sm:$0xff]
  %s104 = scalar_lea.vmem %s0, 225
  %v105 = vld [vmem:[%s104] ss:$2 sm:$0xff]
  %s106 = scalar_lea.vmem %s0, 241
  %v107 = vld [vmem:[%s106] ss:$2 sm:$0x3f]
  %s108 = scalar_lea.vmem %s0, 2
  %v109 = vld [vmem:[%s108] ss:$2 sm:$0xff]
  %s110 = scalar_lea.vmem %s0, 18
  %v111 = vld [vmem:[%s110] ss:$2 sm:$0xff]
  %s112 = scalar_lea.vmem %s0, 34
  %v113 = vld [vmem:[%s112] ss:$2 sm:$0xff]
  %s114 = scalar_lea.vmem %s0, 50
  %v115 = vld [vmem:[%s114] ss:$2 sm:$0xff]
  %s116 = scalar_lea.vmem %s0, 66
  %v117 = vld [vmem:[%s116] ss:$2 sm:$0xff]
  %s118 = scalar_lea.vmem %s0, 82
  %v119 = vld [vmem:[%s118] ss:$2 sm:$0xff]
  %s120 = scalar_lea.vmem %s0, 98
  %v121 = vld [vmem:[%s120] ss:$2 sm:$0xff]
  %s122 = scalar_lea.vmem %s0, 114
  %v123 = vld [vmem:[%s122] ss:$2 sm:$0xff]
  %s124 = scalar_lea.vmem %s0, 130
  %v125 = vld [vmem:[%s124] ss:$2 sm:$0xff]
  %s126 = scalar_lea.vmem %s0, 146
  %v127 = vld [vmem:[%s126] ss:$2 sm:$0xff]
  %s128 = scalar_lea.vmem %s0, 162
  %v129 = vld [vmem:[%s128] ss:$2 sm:$0xff]
  %s130 = scalar_lea.vmem %s0, 178
  %v131 = vld [vmem:[%s130] ss:$2 sm:$0xff]
  %s132 = scalar_lea.vmem %s0, 194
  %v133 = vld [vmem:[%s132] ss:$2 sm:$0xff]
  %s134 = scalar_lea.vmem %s0, 210
  %v135 = vld [vmem:[%s134] ss:$2 sm:$0xff]
  %s136 = scalar_lea.vmem %s0, 226
  %v137 = vld [vmem:[%s136] ss:$2 sm:$0xff]
  %s138 = scalar_lea.vmem %s0, 242
  %v139 = vld [vmem:[%s138] ss:$2 sm:$0x3f]
  %s140 = scalar_lea.vmem %s0, 3
  %v141 = vld [vmem:[%s140] ss:$2 sm:$0xff]
  %s142 = scalar_lea.vmem %s0, 19
  %v143 = vld [vmem:[%s142] ss:$2 sm:$0xff]
  %s144 = scalar_lea.vmem %s0, 35
  %v145 = vld [vmem:[%s144] ss:$2 sm:$0xff]
  %s146 = scalar_lea.vmem %s0, 51
  %v147 = vld [vmem:[%s146] ss:$2 sm:$0xff]
  %s148 = scalar_lea.vmem %s0, 67
  %v149 = vld [vmem:[%s148] ss:$2 sm:$0xff]
  %s150 = scalar_lea.vmem %s0, 83
  %v151 = vld [vmem:[%s150] ss:$2 sm:$0xff]
  %s152 = scalar_lea.vmem %s0, 99
  %v153 = vld [vmem:[%s152] ss:$2 sm:$0xff]
  %s154 = scalar_lea.vmem %s0, 115
  %v155 = vld [vmem:[%s154] ss:$2 sm:$0xff]
  %s156 = scalar_lea.vmem %s0, 131
  %v157 = vld [vmem:[%s156] ss:$2 sm:$0xff]
  %s158 = scalar_lea.vmem %s0, 147
  %v159 = vld [vmem:[%s158] ss:$2 sm:$0xff]
  %s160 = scalar_lea.vmem %s0, 163
  %v161 = vld [vmem:[%s160] ss:$2 sm:$0xff]
  %s162 = scalar_lea.vmem %s0, 179
  %v163 = vld [vmem:[%s162] ss:$2 sm:$0xff]
  %s164 = scalar_lea.vmem %s0, 195
  %v165 = vld [vmem:[%s164] ss:$2 sm:$0xff]
  %s166 = scalar_lea.vmem %s0, 211
  %v167 = vld [vmem:[%s166] ss:$2 sm:$0xff]
  %s168 = scalar_lea.vmem %s0, 227
  %v169 = vld [vmem:[%s168] ss:$2 sm:$0xff]
  %s170 = scalar_lea.vmem %s0, 243
  %v171 = vld [vmem:[%s170] ss:$2 sm:$0x3f]
  %s172 = scalar_lea.vmem %s0, 4
  %v173 = vld [vmem:[%s172] ss:$2 sm:$0xff]
  %s174 = scalar_lea.vmem %s0, 20
  %v175 = vld [vmem:[%s174] ss:$2 sm:$0xff]
  %s176 = scalar_lea.vmem %s0, 36
  %v177 = vld [vmem:[%s176] ss:$2 sm:$0xff]
  %s178 = scalar_lea.vmem %s0, 52
  %v179 = vld [vmem:[%s178] ss:$2 sm:$0xff]
  %s180 = scalar_lea.vmem %s0, 68
  %v181 = vld [vmem:[%s180] ss:$2 sm:$0xff]
  %s182 = scalar_lea.vmem %s0, 84
  %v183 = vld [vmem:[%s182] ss:$2 sm:$0xff]
  %s184 = scalar_lea.vmem %s0, 100
  %v185 = vld [vmem:[%s184] ss:$2 sm:$0xff]
  %s186 = scalar_lea.vmem %s0, 116
  %v187 = vld [vmem:[%s186] ss:$2 sm:$0xff]
  %s188 = scalar_lea.vmem %s0, 132
  %v189 = vld [vmem:[%s188] ss:$2 sm:$0xff]
  %s190 = scalar_lea.vmem %s0, 148
  %v191 = vld [vmem:[%s190] ss:$2 sm:$0xff]
  %s192 = scalar_lea.vmem %s0, 164
  %v193 = vld [vmem:[%s192] ss:$2 sm:$0xff]
  %s194 = scalar_lea.vmem %s0, 180
  %v195 = vld [vmem:[%s194] ss:$2 sm:$0xff]
  %s196 = scalar_lea.vmem %s0, 196
  %v197 = vld [vmem:[%s196] ss:$2 sm:$0xff]
  %s198 = scalar_lea.vmem %s0, 212
  %v199 = vld [vmem:[%s198] ss:$2 sm:$0xff]
  %s200 = scalar_lea.vmem %s0, 228
  %v201 = vld [vmem:[%s200] ss:$2 sm:$0xff]
  %s202 = scalar_lea.vmem %s0, 244
  %v203 = vld [vmem:[%s202] ss:$2 sm:$0x3f]
  %220 = vrot.lane.b32.xlu0 %v77, 24
  %v221 = vpop.permute.xlu0 %220
  %222 = vrot.lane.b32.xlu0 %v79, 24
  %v223 = vpop.permute.xlu0 %222
  %224 = vrot.lane.b32.xlu0 %v81, 24
  %v225 = vpop.permute.xlu0 %224
  %226 = vrot.lane.b32.xlu0 %v83, 24
  %v227 = vpop.permute.xlu0 %226
  %228 = vrot.lane.b32.xlu0 %v85, 24
  %v229 = vpop.permute.xlu0 %228
  %230 = vrot.lane.b32.xlu0 %v87, 24
  %v231 = vpop.permute.xlu0 %230
  %232 = vrot.lane.b32.xlu0 %v89, 24
  %v233 = vpop.permute.xlu0 %232
  %234 = vrot.lane.b32.xlu0 %v91, 24
  %v235 = vpop.permute.xlu0 %234
  %236 = vrot.lane.b32.xlu0 %v93, 24
  %v237 = vpop.permute.xlu0 %236
  %238 = vrot.lane.b32.xlu0 %v95, 24
  %v239 = vpop.permute.xlu0 %238
  %240 = vrot.lane.b32.xlu0 %v97, 24
  %v241 = vpop.permute.xlu0 %240
  %242 = vrot.lane.b32.xlu0 %v99, 24
  %v243 = vpop.permute.xlu0 %242
  %244 = vrot.lane.b32.xlu0 %v101, 24
  %v245 = vpop.permute.xlu0 %244
  %246 = vrot.lane.b32.xlu0 %v103, 24
  %v247 = vpop.permute.xlu0 %246
  %248 = vrot.lane.b32.xlu0 %v105, 24
  %v249 = vpop.permute.xlu0 %248
  %250 = vrot.lane.b32.xlu0 %v107, 24
  %v251 = vpop.permute.xlu0 %250
  %284 = vrot.lane.b32.xlu0 %v109, 48
  %v285 = vpop.permute.xlu0 %284
  %286 = vrot.lane.b32.xlu0 %v111, 48
  %v287 = vpop.permute.xlu0 %286
  %288 = vrot.lane.b32.xlu0 %v113, 48
  %v289 = vpop.permute.xlu0 %288
  %290 = vrot.lane.b32.xlu0 %v115, 48
  %v291 = vpop.permute.xlu0 %290
  %292 = vrot.lane.b32.xlu0 %v117, 48
  %v293 = vpop.permute.xlu0 %292
  %294 = vrot.lane.b32.xlu0 %v119, 48
  %v295 = vpop.permute.xlu0 %294
  %296 = vrot.lane.b32.xlu0 %v121, 48
  %v297 = vpop.permute.xlu0 %296
  %298 = vrot.lane.b32.xlu0 %v123, 48
  %v299 = vpop.permute.xlu0 %298
  %300 = vrot.lane.b32.xlu0 %v125, 48
  %v301 = vpop.permute.xlu0 %300
  %302 = vrot.lane.b32.xlu0 %v127, 48
  %v303 = vpop.permute.xlu0 %302
  %304 = vrot.lane.b32.xlu0 %v129, 48
  %v305 = vpop.permute.xlu0 %304
  %306 = vrot.lane.b32.xlu0 %v131, 48
  %v307 = vpop.permute.xlu0 %306
  %308 = vrot.lane.b32.xlu0 %v133, 48
  %v309 = vpop.permute.xlu0 %308
  %310 = vrot.lane.b32.xlu0 %v135, 48
  %v311 = vpop.permute.xlu0 %310
  %312 = vrot.lane.b32.xlu0 %v137, 48
  %v313 = vpop.permute.xlu0 %312
  %314 = vrot.lane.b32.xlu0 %v139, 48
  %v315 = vpop.permute.xlu0 %314
  %348 = vrot.lane.b32.xlu0 %v141, 72
  %v349 = vpop.permute.xlu0 %348
  %350 = vrot.lane.b32.xlu0 %v143, 72
  %v351 = vpop.permute.xlu0 %350
  %352 = vrot.lane.b32.xlu0 %v145, 72
  %v353 = vpop.permute.xlu0 %352
  %354 = vrot.lane.b32.xlu0 %v147, 72
  %v355 = vpop.permute.xlu0 %354
  %356 = vrot.lane.b32.xlu0 %v149, 72
  %v357 = vpop.permute.xlu0 %356
  %358 = vrot.lane.b32.xlu0 %v151, 72
  %v359 = vpop.permute.xlu0 %358
  %360 = vrot.lane.b32.xlu0 %v153, 72
  %v361 = vpop.permute.xlu0 %360
  %362 = vrot.lane.b32.xlu0 %v155, 72
  %v363 = vpop.permute.xlu0 %362
  %364 = vrot.lane.b32.xlu0 %v157, 72
  %v365 = vpop.permute.xlu0 %364
  %366 = vrot.lane.b32.xlu0 %v159, 72
  %v367 = vpop.permute.xlu0 %366
  %368 = vrot.lane.b32.xlu0 %v161, 72
  %v369 = vpop.permute.xlu0 %368
  %370 = vrot.lane.b32.xlu0 %v163, 72
  %v371 = vpop.permute.xlu0 %370
  %372 = vrot.lane.b32.xlu0 %v165, 72
  %v373 = vpop.permute.xlu0 %372
  %374 = vrot.lane.b32.xlu0 %v167, 72
  %v375 = vpop.permute.xlu0 %374
  %376 = vrot.lane.b32.xlu0 %v169, 72
  %v377 = vpop.permute.xlu0 %376
  %378 = vrot.lane.b32.xlu0 %v171, 72
  %v379 = vpop.permute.xlu0 %378
  %412 = vrot.lane.b32.xlu0 %v173, 96
  %v413 = vpop.permute.xlu0 %412
  %414 = vrot.lane.b32.xlu0 %v175, 96
  %v415 = vpop.permute.xlu0 %414
  %416 = vrot.lane.b32.xlu0 %v177, 96
  %v417 = vpop.permute.xlu0 %416
  %418 = vrot.lane.b32.xlu0 %v179, 96
  %v419 = vpop.permute.xlu0 %418
  %420 = vrot.lane.b32.xlu0 %v181, 96
  %v421 = vpop.permute.xlu0 %420
  %422 = vrot.lane.b32.xlu0 %v183, 96
  %v423 = vpop.permute.xlu0 %422
  %424 = vrot.lane.b32.xlu0 %v185, 96
  %v425 = vpop.permute.xlu0 %424
  %426 = vrot.lane.b32.xlu0 %v187, 96
  %v427 = vpop.permute.xlu0 %426
  %428 = vrot.lane.b32.xlu0 %v189, 96
  %v429 = vpop.permute.xlu0 %428
  %430 = vrot.lane.b32.xlu0 %v191, 96
  %v431 = vpop.permute.xlu0 %430
  %432 = vrot.lane.b32.xlu0 %v193, 96
  %v433 = vpop.permute.xlu0 %432
  %434 = vrot.lane.b32.xlu0 %v195, 96
  %v435 = vpop.permute.xlu0 %434
  %436 = vrot.lane.b32.xlu0 %v197, 96
  %v437 = vpop.permute.xlu0 %436
  %438 = vrot.lane.b32.xlu0 %v199, 96
  %v439 = vpop.permute.xlu0 %438
  %440 = vrot.lane.b32.xlu0 %v201, 96
  %v441 = vpop.permute.xlu0 %440
  %442 = vrot.lane.b32.xlu0 %v203, 96
  %v443 = vpop.permute.xlu0 %442
  %vm460 = vcmask 195584
  %v461 = vsel %vm460, %v45, %v221
  %v462 = vsel %vm460, %v47, %v223
  %v463 = vsel %vm460, %v49, %v225
  %v464 = vsel %vm460, %v51, %v227
  %v465 = vsel %vm460, %v53, %v229
  %v466 = vsel %vm460, %v55, %v231
  %v467 = vsel %vm460, %v57, %v233
  %v468 = vsel %vm460, %v59, %v235
  %v469 = vsel %vm460, %v61, %v237
  %v470 = vsel %vm460, %v63, %v239
  %v471 = vsel %vm460, %v65, %v241
  %v472 = vsel %vm460, %v67, %v243
  %v473 = vsel %vm460, %v69, %v245
  %v474 = vsel %vm460, %v71, %v247
  %v475 = vsel %vm460, %v73, %v249
  %v476 = vsel %vm460, %v75, %v251
  %vm477 = vcmask 392192
  %v478 = vsel %vm477, %v461, %v285
  %v479 = vsel %vm477, %v462, %v287
  %v480 = vsel %vm477, %v463, %v289
  %v481 = vsel %vm477, %v464, %v291
  %v482 = vsel %vm477, %v465, %v293
  %v483 = vsel %vm477, %v466, %v295
  %v484 = vsel %vm477, %v467, %v297
  %v485 = vsel %vm477, %v468, %v299
  %v486 = vsel %vm477, %v469, %v301
  %v487 = vsel %vm477, %v470, %v303
  %v488 = vsel %vm477, %v471, %v305
  %v489 = vsel %vm477, %v472, %v307
  %v490 = vsel %vm477, %v473, %v309
  %v491 = vsel %vm477, %v474, %v311
  %v492 = vsel %vm477, %v475, %v313
  %v493 = vsel %vm477, %v476, %v315
  %vm494 = vcmask 588800
  %v495 = vsel %vm494, %v478, %v349
  %v496 = vsel %vm494, %v479, %v351
  %v497 = vsel %vm494, %v480, %v353
  %v498 = vsel %vm494, %v481, %v355
  %v499 = vsel %vm494, %v482, %v357
  %v500 = vsel %vm494, %v483, %v359
  %v501 = vsel %vm494, %v484, %v361
  %v502 = vsel %vm494, %v485, %v363
  %v503 = vsel %vm494, %v486, %v365
  %v504 = vsel %vm494, %v487, %v367
  %v505 = vsel %vm494, %v488, %v369
  %v506 = vsel %vm494, %v489, %v371
  %v507 = vsel %vm494, %v490, %v373
  %v508 = vsel %vm494, %v491, %v375
  %v509 = vsel %vm494, %v492, %v377
  %v510 = vsel %vm494, %v493, %v379
  %vm511 = vcmask 785408
  %v512 = vsel %vm511, %v495, %v413
  %v513 = vsel %vm511, %v496, %v415
  %v514 = vsel %vm511, %v497, %v417
  %v515 = vsel %vm511, %v498, %v419
  %v516 = vsel %vm511, %v499, %v421
  %v517 = vsel %vm511, %v500, %v423
  %v518 = vsel %vm511, %v501, %v425
  %v519 = vsel %vm511, %v502, %v427
  %v520 = vsel %vm511, %v503, %v429
  %v521 = vsel %vm511, %v504, %v431
  %v522 = vsel %vm511, %v505, %v433
  %v523 = vsel %vm511, %v506, %v435
  %v524 = vsel %vm511, %v507, %v437
  %v525 = vsel %vm511, %v508, %v439
  %v526 = vsel %vm511, %v509, %v441
  %v527 = vsel %vm511, %v510, %v443
  %v528 = vld [vmem:[%s1] sm:$0xff]
  %v529 = vld [vmem:[%s1 + $0x8] sm:$0xff]
  %v530 = vld [vmem:[%s1 + $0x10] sm:$0xff]
  %v531 = vld [vmem:[%s1 + $0x18] sm:$0xff]
  %v532 = vld [vmem:[%s1 + $0x20] sm:$0xff]
  %v533 = vld [vmem:[%s1 + $0x28] sm:$0xff]
  %v534 = vld [vmem:[%s1 + $0x30] sm:$0xff]
  %v535 = vld [vmem:[%s1 + $0x38] sm:$0xff]
  %v536 = vld [vmem:[%s1 + $0x40] sm:$0xff]
  %v537 = vld [vmem:[%s1 + $0x48] sm:$0xff]
  %v538 = vld [vmem:[%s1 + $0x50] sm:$0xff]
  %v539 = vld [vmem:[%s1 + $0x58] sm:$0xff]
  %v540 = vld [vmem:[%s1 + $0x60] sm:$0xff]
  %v541 = vld [vmem:[%s1 + $0x68] sm:$0xff]
  %v542 = vld [vmem:[%s1 + $0x70] sm:$0xff]
  %v543 = vld [vmem:[%s4] sm:$0x1]
  %v545 = vlaneseq
  %v546 = vshrl.u32 %v545, 7
  %v547 = vsub.s32 0, %v546
  %v548 = vrot.slane %v543, %v547
  %vm550 = vcmask 982016
  %v552 = vsel %vm550, %v512, 0
  %v555 = vsel %vm550, %v513, 0
  %v558 = vsel %vm550, %v514, 0
  %v561 = vsel %vm550, %v515, 0
  %v564 = vsel %vm550, %v516, 0
  %v567 = vsel %vm550, %v517, 0
  %v570 = vsel %vm550, %v518, 0
  %v573 = vsel %vm550, %v519, 0
  %v576 = vsel %vm550, %v520, 0
  %v579 = vsel %vm550, %v521, 0
  %v582 = vsel %vm550, %v522, 0
  %v585 = vsel %vm550, %v523, 0
  %v588 = vsel %vm550, %v524, 0
  %v591 = vsel %vm550, %v525, 0
  %v594 = vsel %vm550, %v526, 0
  %v597 = vsel %vm550, %v527, 0
  %599 = vmatprep.subr.mxu0 0.0
  %600 = vmatpush1.msra.mxu0 %v528
  %601 = vmatprep.subr.mxu0 0.0
  %602 = vmatpush1.msra.mxu0 %v529
  %603 = vmatprep.subr.mxu0 0.0
  %604 = vmatpush1.msra.mxu0 %v530
  %605 = vmatprep.subr.mxu0 0.0
  %606 = vmatpush1.msra.mxu0 %v531
  %607 = vmatprep.subr.mxu0 0.0
  %608 = vmatpush1.msra.mxu0 %v532
  %609 = vmatprep.subr.mxu0 0.0
  %610 = vmatpush1.msra.mxu0 %v533
  %611 = vmatprep.subr.mxu0 0.0
  %612 = vmatpush1.msra.mxu0 %v534
  %613 = vmatprep.subr.mxu0 0.0
  %614 = vmatpush1.msra.mxu0 %v535
  %615 = vmatprep.subr.mxu0 0.0
  %616 = vmatpush1.msra.mxu0 %v536
  %617 = vmatprep.subr.mxu0 0.0
  %618 = vmatpush1.msra.mxu0 %v537
  %619 = vmatprep.subr.mxu0 0.0
  %620 = vmatpush1.msra.mxu0 %v538
  %621 = vmatprep.subr.mxu0 0.0
  %622 = vmatpush1.msra.mxu0 %v539
  %623 = vmatprep.subr.mxu0 0.0
  %624 = vmatpush1.msra.mxu0 %v540
  %625 = vmatprep.subr.mxu0 0.0
  %626 = vmatpush1.msra.mxu0 %v541
  %627 = vmatprep.subr.mxu0 0.0
  %628 = vmatpush1.msra.mxu0 %v542
  %629 = vmatprep.subr.mxu0 0.0
  %630 = vmatpush1.msra.mxu0 0.0
  %631 = vmatprep.subr.mxu0 0.0
  %632 = vmatpush1.msra.mxu0 0.0
  %633 = vmatprep.subr.mxu0 0.0
  %634 = vmatpush1.msra.mxu0 0.0
  %635 = vmatprep.subr.mxu0 0.0
  %636 = vmatpush1.msra.mxu0 0.0
  %637 = vmatprep.subr.mxu0 0.0
  %638 = vmatpush1.msra.mxu0 0.0
  %639 = vmatprep.subr.mxu0 0.0
  %640 = vmatpush1.msra.mxu0 0.0
  %641 = vmatprep.subr.mxu0 0.0
  %642 = vmatpush1.msra.mxu0 0.0
  %643 = vmatprep.subr.mxu0 0.0
  %644 = vmatpush1.msra.mxu0 0.0
  %645 = vmatprep.subr.mxu0 0.0
  %646 = vmatpush1.msra.mxu0 0.0
  %647 = vmatprep.subr.mxu0 0.0
  %648 = vmatpush1.msra.mxu0 0.0
  %649 = vmatprep.subr.mxu0 0.0
  %650 = vmatpush1.msra.mxu0 0.0
  %651 = vmatprep.subr.mxu0 0.0
  %652 = vmatpush1.msra.mxu0 0.0
  %653 = vmatprep.subr.mxu0 0.0
  %654 = vmatpush1.msra.mxu0 0.0
  %655 = vmatprep.subr.mxu0 0.0
  %656 = vmatpush1.msra.mxu0 0.0
  %657 = vmatprep.subr.mxu0 0.0
  %658 = vmatpush1.msra.mxu0 0.0
  %659 = vmatprep.subr.mxu0 0.0
  %660 = vmatpush1.msra.mxu0 0.0
  %661 = vmatprep.subr.mxu0 0.0
  %662 = vmatpush1.msra.mxu0 0.0
  %663 = vmatprep.mubr.f32.mxu0 0.0
  %664 = vmatmul.mubr.f32.gmra.mrb[0].mxu0 %v552
  %v665 = vpop.f32.mrb[0].mxu0
  %v666 = vadd.f32 %v548, %v665
  %v667 = vpop.f32.mrb[0].mxu0
  %668 = vmatprep.mubr.f32.mxu0 0.0
  %669 = vmatmul.mubr.f32.gmra.mrb[0].mxu0 %v555
  %v670 = vpop.f32.mrb[0].mxu0
  %v671 = vadd.f32 %v548, %v670
  %v672 = vpop.f32.mrb[0].mxu0
  %673 = vmatprep.mubr.f32.mxu0 0.0
  %674 = vmatmul.mubr.f32.gmra.mrb[0].mxu0 %v558
  %v675 = vpop.f32.mrb[0].mxu0
  %v676 = vadd.f32 %v548, %v675
  %v677 = vpop.f32.mrb[0].mxu0
  %678 = vmatprep.mubr.f32.mxu0 0.0
  %679 = vmatmul.mubr.f32.gmra.mrb[0].mxu0 %v561
  %v680 = vpop.f32.mrb[0].mxu0
  %v681 = vadd.f32 %v548, %v680
  %v682 = vpop.f32.mrb[0].mxu0
  %683 = vmatprep.mubr.f32.mxu0 0.0
  %684 = vmatmul.mubr.f32.gmra.mrb[0].mxu0 %v564
  %v685 = vpop.f32.mrb[0].mxu0
  %v686 = vadd.f32 %v548, %v685
  %v687 = vpop.f32.mrb[0].mxu0
  %688 = vmatprep.mubr.f32.mxu0 0.0
  %689 = vmatmul.mubr.f32.gmra.mrb[0].mxu0 %v567
  %v690 = vpop.f32.mrb[0].mxu0
  %v691 = vadd.f32 %v548, %v690
  %v692 = vpop.f32.mrb[0].mxu0
  %693 = vmatprep.mubr.f32.mxu0 0.0
  %694 = vmatmul.mubr.f32.gmra.mrb[0].mxu0 %v570
  %v695 = vpop.f32.mrb[0].mxu0
  %v696 = vadd.f32 %v548, %v695
  %v697 = vpop.f32.mrb[0].mxu0
  %698 = vmatprep.mubr.f32.mxu0 0.0
  %699 = vmatmul.mubr.f32.gmra.mrb[0].mxu0 %v573
  %v700 = vpop.f32.mrb[0].mxu0
  %v701 = vadd.f32 %v548, %v700
  %v702 = vpop.f32.mrb[0].mxu0
  %703 = vmatprep.mubr.f32.mxu0 0.0
  %704 = vmatmul.mubr.f32.gmra.mrb[0].mxu0 %v576
  %v705 = vpop.f32.mrb[0].mxu0
  %v706 = vadd.f32 %v548, %v705
  %v707 = vpop.f32.mrb[0].mxu0
  %708 = vmatprep.mubr.f32.mxu0 0.0
  %709 = vmatmul.mubr.f32.gmra.mrb[0].mxu0 %v579
  %v710 = vpop.f32.mrb[0].mxu0
  %v711 = vadd.f32 %v548, %v710
  %v712 = vpop.f32.mrb[0].mxu0
  %713 = vmatprep.mubr.f32.mxu0 0.0
  %714 = vmatmul.mubr.f32.gmra.mrb[0].mxu0 %v582
  %v715 = vpop.f32.mrb[0].mxu0
  %v716 = vadd.f32 %v548, %v715
  %v717 = vpop.f32.mrb[0].mxu0
  %718 = vmatprep.mubr.f32.mxu0 0.0
  %719 = vmatmul.mubr.f32.gmra.mrb[0].mxu0 %v585
  %v720 = vpop.f32.mrb[0].mxu0
  %v721 = vadd.f32 %v548, %v720
  %v722 = vpop.f32.mrb[0].mxu0
  %723 = vmatprep.mubr.f32.mxu0 0.0
  %724 = vmatmul.mubr.f32.gmra.mrb[0].mxu0 %v588
  %v725 = vpop.f32.mrb[0].mxu0
  %v726 = vadd.f32 %v548, %v725
  %v727 = vpop.f32.mrb[0].mxu0
  %728 = vmatprep.mubr.f32.mxu0 0.0
  %729 = vmatmul.mubr.f32.gmra.mrb[0].mxu0 %v591
  %v730 = vpop.f32.mrb[0].mxu0
  %v731 = vadd.f32 %v548, %v730
  %v732 = vpop.f32.mrb[0].mxu0
  %733 = vmatprep.mubr.f32.mxu0 0.0
  %734 = vmatmul.mubr.f32.gmra.mrb[0].mxu0 %v594
  %v735 = vpop.f32.mrb[0].mxu0
  %v736 = vadd.f32 %v548, %v735
  %v737 = vpop.f32.mrb[0].mxu0
  %738 = vmatprep.mubr.f32.mxu0 0.0
  %739 = vmatmul.mubr.f32.gmra.mrb[0].mxu0 %v597
  %v740 = vpop.f32.mrb[0].mxu0
  %v741 = vadd.f32 %v548, %v740
  %v742 = vpop.f32.mrb[0].mxu0
  %743 = vdwg.mxu0
  %v744 = vmax.f32 %v666, 0.0
  %v745 = vmax.f32 %v671, 0.0
  %v746 = vmax.f32 %v676, 0.0
  %v747 = vmax.f32 %v681, 0.0
  %v748 = vmax.f32 %v686, 0.0
  %v749 = vmax.f32 %v691, 0.0
  %v750 = vmax.f32 %v696, 0.0
  %v751 = vmax.f32 %v701, 0.0
  %v752 = vmax.f32 %v706, 0.0
  %v753 = vmax.f32 %v711, 0.0
  %v754 = vmax.f32 %v716, 0.0
  %v755 = vmax.f32 %v721, 0.0
  %v756 = vmax.f32 %v726, 0.0
  %v757 = vmax.f32 %v731, 0.0
  %v758 = vmax.f32 %v736, 0.0
  %v759 = vmax.f32 %v741, 0.0
  %v760 = vld [vmem:[%s10] sm:$0xff]
  %v761 = vld [vmem:[%s10 + $0x8] sm:$0xff]
  %v762 = vld [vmem:[%s10 + $0x10] sm:$0xff]
  %v763 = vld [vmem:[%s10 + $0x18] sm:$0xff]
  %v764 = vld [vmem:[%s10 + $0x20] sm:$0xff]
  %v765 = vld [vmem:[%s10 + $0x28] sm:$0xff]
  %v766 = vld [vmem:[%s10 + $0x30] sm:$0xff]
  %v767 = vld [vmem:[%s10 + $0x38] sm:$0xff]
  %v768 = vld [vmem:[%s10 + $0x40] sm:$0xff]
  %v769 = vld [vmem:[%s10 + $0x48] sm:$0xff]
  %v770 = vld [vmem:[%s10 + $0x50] sm:$0xff]
  %v771 = vld [vmem:[%s10 + $0x58] sm:$0xff]
  %v772 = vld [vmem:[%s10 + $0x60] sm:$0xff]
  %v773 = vld [vmem:[%s10 + $0x68] sm:$0xff]
  %v774 = vld [vmem:[%s10 + $0x70] sm:$0xff]
  %v775 = vld [vmem:[%s10 + $0x78] sm:$0x3f]
  %777 = vset.pattern.permute.xlu0 0
  %778 = vperm.xlu0 %777, %v760
  %v779 = vpop.permute.xlu0 %778
  %782 = vset.pattern.permute.xlu0 0
  %783 = vperm.xlu0 %782, %v761
  %v784 = vpop.permute.xlu0 %783
  %787 = vset.pattern.permute.xlu0 0
  %788 = vperm.xlu0 %787, %v762
  %v789 = vpop.permute.xlu0 %788
  %792 = vset.pattern.permute.xlu0 0
  %793 = vperm.xlu0 %792, %v763
  %v794 = vpop.permute.xlu0 %793
  %797 = vset.pattern.permute.xlu0 0
  %798 = vperm.xlu0 %797, %v764
  %v799 = vpop.permute.xlu0 %798
  %802 = vset.pattern.permute.xlu0 0
  %803 = vperm.xlu0 %802, %v765
  %v804 = vpop.permute.xlu0 %803
  %807 = vset.pattern.permute.xlu0 0
  %808 = vperm.xlu0 %807, %v766
  %v809 = vpop.permute.xlu0 %808
  %812 = vset.pattern.permute.xlu0 0
  %813 = vperm.xlu0 %812, %v767
  %v814 = vpop.permute.xlu0 %813
  %817 = vset.pattern.permute.xlu0 0
  %818 = vperm.xlu0 %817, %v768
  %v819 = vpop.permute.xlu0 %818
  %822 = vset.pattern.permute.xlu0 0
  %823 = vperm.xlu0 %822, %v769
  %v824 = vpop.permute.xlu0 %823
  %827 = vset.pattern.permute.xlu0 0
  %828 = vperm.xlu0 %827, %v770
  %v829 = vpop.permute.xlu0 %828
  %832 = vset.pattern.permute.xlu0 0
  %833 = vperm.xlu0 %832, %v771
  %v834 = vpop.permute.xlu0 %833
  %837 = vset.pattern.permute.xlu0 0
  %838 = vperm.xlu0 %837, %v772
  %v839 = vpop.permute.xlu0 %838
  %842 = vset.pattern.permute.xlu0 0
  %843 = vperm.xlu0 %842, %v773
  %v844 = vpop.permute.xlu0 %843
  %847 = vset.pattern.permute.xlu0 0
  %848 = vperm.xlu0 %847, %v774
  %v849 = vpop.permute.xlu0 %848
  %852 = vset.pattern.permute.xlu0 0
  %853 = vperm.xlu0 %852, %v775
  %v854 = vpop.permute.xlu0 %853
  %v856 = vmul.f32 %v744, %v779
  %v857 = vmul.f32 %v745, %v784
  %v858 = vmul.f32 %v746, %v789
  %v859 = vmul.f32 %v747, %v794
  %v860 = vmul.f32 %v748, %v799
  %v861 = vmul.f32 %v749, %v804
  %v862 = vmul.f32 %v750, %v809
  %v863 = vmul.f32 %v751, %v814
  %v864 = vmul.f32 %v752, %v819
  %v865 = vmul.f32 %v753, %v824
  %v866 = vmul.f32 %v754, %v829
  %v867 = vmul.f32 %v755, %v834
  %v868 = vmul.f32 %v756, %v839
  %v869 = vmul.f32 %v757, %v844
  %v870 = vmul.f32 %v758, %v849
  %v871 = vmul.f32 %v759, %v854
  %vm872 = vcmask 261120
  %873 = vst.msk [vmem:[#allocation2 + $0x2] sm:$0xff] %vm872, %v856
  %874 = vst.msk [vmem:[#allocation2 + $0xa] sm:$0xff] %vm872, %v857
  %875 = vst.msk [vmem:[#allocation2 + $0x12] sm:$0xff] %vm872, %v858
  %876 = vst.msk [vmem:[#allocation2 + $0x1a] sm:$0xff] %vm872, %v859
  %877 = vst.msk [vmem:[#allocation2 + $0x22] sm:$0xff] %vm872, %v860
  %878 = vst.msk [vmem:[#allocation2 + $0x2a] sm:$0xff] %vm872, %v861
  %879 = vst.msk [vmem:[#allocation2 + $0x32] sm:$0xff] %vm872, %v862
  %880 = vst.msk [vmem:[#allocation2 + $0x3a] sm:$0xff] %vm872, %v863
  %881 = vst.msk [vmem:[#allocation2 + $0x42] sm:$0xff] %vm872, %v864
  %882 = vst.msk [vmem:[#allocation2 + $0x4a] sm:$0xff] %vm872, %v865
  %883 = vst.msk [vmem:[#allocation2 + $0x52] sm:$0xff] %vm872, %v866
  %884 = vst.msk [vmem:[#allocation2 + $0x5a] sm:$0xff] %vm872, %v867
  %885 = vst.msk [vmem:[#allocation2 + $0x62] sm:$0xff] %vm872, %v868
  %886 = vst.msk [vmem:[#allocation2 + $0x6a] sm:$0xff] %vm872, %v869
  %887 = vst.msk [vmem:[#allocation2 + $0x72] sm:$0xff] %vm872, %v870
  %vm888 = vcmask 259072
  %889 = vst.msk [vmem:[#allocation2 + $0x7a] sm:$0x3f] %vm888, %v871
  %v890 = vld [vmem:[#allocation2] ss:$2 sm:$0xff]
  %s891 = scalar_lea.vmem [#allocation2], 16
  %v892 = vld [vmem:[%s891] ss:$2 sm:$0xff]
  %s893 = scalar_lea.vmem [#allocation2], 32
  %v894 = vld [vmem:[%s893] ss:$2 sm:$0xff]
  %s895 = scalar_lea.vmem [#allocation2], 48
  %v896 = vld [vmem:[%s895] ss:$2 sm:$0xff]
  %s897 = scalar_lea.vmem [#allocation2], 64
  %v898 = vld [vmem:[%s897] ss:$2 sm:$0xff]
  %s899 = scalar_lea.vmem [#allocation2], 80
  %v900 = vld [vmem:[%s899] ss:$2 sm:$0xff]
  %s901 = scalar_lea.vmem [#allocation2], 96
  %v902 = vld [vmem:[%s901] ss:$2 sm:$0xff]
  %s903 = scalar_lea.vmem [#allocation2], 112
  %v904 = vld [vmem:[%s903] ss:$2 sm:$0x3f]
  %s905 = scalar_lea.vmem [#allocation2], 1
  %v906 = vld [vmem:[%s905] ss:$2 sm:$0xff]
  %s907 = scalar_lea.vmem [#allocation2], 17
  %v908 = vld [vmem:[%s907] ss:$2 sm:$0xff]
  %s909 = scalar_lea.vmem [#allocation2], 33
  %v910 = vld [vmem:[%s909] ss:$2 sm:$0xff]
  %s911 = scalar_lea.vmem [#allocation2], 49
  %v912 = vld [vmem:[%s911] ss:$2 sm:$0xff]
  %s913 = scalar_lea.vmem [#allocation2], 65
  %v914 = vld [vmem:[%s913] ss:$2 sm:$0xff]
  %s915 = scalar_lea.vmem [#allocation2], 81
  %v916 = vld [vmem:[%s915] ss:$2 sm:$0xff]
  %s917 = scalar_lea.vmem [#allocation2], 97
  %v918 = vld [vmem:[%s917] ss:$2 sm:$0xff]
  %s919 = scalar_lea.vmem [#allocation2], 113
  %v920 = vld [vmem:[%s919] ss:$2 sm:$0x3f]
  %s921 = scalar_lea.vmem [#allocation2], 2
  %v922 = vld [vmem:[%s921] ss:$2 sm:$0xff]
  %s923 = scalar_lea.vmem [#allocation2], 18
  %v924 = vld [vmem:[%s923] ss:$2 sm:$0xff]
  %s925 = scalar_lea.vmem [#allocation2], 34
  %v926 = vld [vmem:[%s925] ss:$2 sm:$0xff]
  %s927 = scalar_lea.vmem [#allocation2], 50
  %v928 = vld [vmem:[%s927] ss:$2 sm:$0xff]
  %s929 = scalar_lea.vmem [#allocation2], 66
  %v930 = vld [vmem:[%s929] ss:$2 sm:$0xff]
  %s931 = scalar_lea.vmem [#allocation2], 82
  %v932 = vld [vmem:[%s931] ss:$2 sm:$0xff]
  %s933 = scalar_lea.vmem [#allocation2], 98
  %v934 = vld [vmem:[%s933] ss:$2 sm:$0xff]
  %s935 = scalar_lea.vmem [#allocation2], 114
  %v936 = vld [vmem:[%s935] ss:$2 sm:$0x3f]
  %s937 = scalar_lea.vmem [#allocation2], 3
  %v938 = vld [vmem:[%s937] ss:$2 sm:$0xff]
  %s939 = scalar_lea.vmem [#allocation2], 19
  %v940 = vld [vmem:[%s939] ss:$2 sm:$0xff]
  %s941 = scalar_lea.vmem [#allocation2], 35
  %v942 = vld [vmem:[%s941] ss:$2 sm:$0xff]
  %s943 = scalar_lea.vmem [#allocation2], 51
  %v944 = vld [vmem:[%s943] ss:$2 sm:$0xff]
  %s945 = scalar_lea.vmem [#allocation2], 67
  %v946 = vld [vmem:[%s945] ss:$2 sm:$0xff]
  %s947 = scalar_lea.vmem [#allocation2], 83
  %v948 = vld [vmem:[%s947] ss:$2 sm:$0xff]
  %s949 = scalar_lea.vmem [#allocation2], 99
  %v950 = vld [vmem:[%s949] ss:$2 sm:$0xff]
  %s951 = scalar_lea.vmem [#allocation2], 115
  %v952 = vld [vmem:[%s951] ss:$2 sm:$0x3f]
  %s953 = scalar_lea.vmem [#allocation2], 4
  %v954 = vld [vmem:[%s953] ss:$2 sm:$0xff]
  %s955 = scalar_lea.vmem [#allocation2], 20
  %v956 = vld [vmem:[%s955] ss:$2 sm:$0xff]
  %s957 = scalar_lea.vmem [#allocation2], 36
  %v958 = vld [vmem:[%s957] ss:$2 sm:$0xff]
  %s959 = scalar_lea.vmem [#allocation2], 52
  %v960 = vld [vmem:[%s959] ss:$2 sm:$0xff]
  %s961 = scalar_lea.vmem [#allocation2], 68
  %v962 = vld [vmem:[%s961] ss:$2 sm:$0xff]
  %s963 = scalar_lea.vmem [#allocation2], 84
  %v964 = vld [vmem:[%s963] ss:$2 sm:$0xff]
  %s965 = scalar_lea.vmem [#allocation2], 100
  %v966 = vld [vmem:[%s965] ss:$2 sm:$0xff]
  %s967 = scalar_lea.vmem [#allocation2], 116
  %v968 = vld [vmem:[%s967] ss:$2 sm:$0x3f]
  %977 = vrot.lane.b32.xlu0 %v906, 32
  %v978 = vpop.permute.xlu0 %977
  %979 = vrot.lane.b32.xlu0 %v908, 32
  %v980 = vpop.permute.xlu0 %979
  %981 = vrot.lane.b32.xlu0 %v910, 32
  %v982 = vpop.permute.xlu0 %981
  %983 = vrot.lane.b32.xlu0 %v912, 32
  %v984 = vpop.permute.xlu0 %983
  %985 = vrot.lane.b32.xlu0 %v914, 32
  %v986 = vpop.permute.xlu0 %985
  %987 = vrot.lane.b32.xlu0 %v916, 32
  %v988 = vpop.permute.xlu0 %987
  %989 = vrot.lane.b32.xlu0 %v918, 32
  %v990 = vpop.permute.xlu0 %989
  %991 = vrot.lane.b32.xlu0 %v920, 32
  %v992 = vpop.permute.xlu0 %991
  %1009 = vrot.lane.b32.xlu0 %v922, 64
  %v1010 = vpop.permute.xlu0 %1009
  %1011 = vrot.lane.b32.xlu0 %v924, 64
  %v1012 = vpop.permute.xlu0 %1011
  %1013 = vrot.lane.b32.xlu0 %v926, 64
  %v1014 = vpop.permute.xlu0 %1013
  %1015 = vrot.lane.b32.xlu0 %v928, 64
  %v1016 = vpop.permute.xlu0 %1015
  %1017 = vrot.lane.b32.xlu0 %v930, 64
  %v1018 = vpop.permute.xlu0 %1017
  %1019 = vrot.lane.b32.xlu0 %v932, 64
  %v1020 = vpop.permute.xlu0 %1019
  %1021 = vrot.lane.b32.xlu0 %v934, 64
  %v1022 = vpop.permute.xlu0 %1021
  %1023 = vrot.lane.b32.xlu0 %v936, 64
  %v1024 = vpop.permute.xlu0 %1023
  %1041 = vrot.lane.b32.xlu0 %v938, 96
  %v1042 = vpop.permute.xlu0 %1041
  %1043 = vrot.lane.b32.xlu0 %v940, 96
  %v1044 = vpop.permute.xlu0 %1043
  %1045 = vrot.lane.b32.xlu0 %v942, 96
  %v1046 = vpop.permute.xlu0 %1045
  %1047 = vrot.lane.b32.xlu0 %v944, 96
  %v1048 = vpop.permute.xlu0 %1047
  %1049 = vrot.lane.b32.xlu0 %v946, 96
  %v1050 = vpop.permute.xlu0 %1049
  %1051 = vrot.lane.b32.xlu0 %v948, 96
  %v1052 = vpop.permute.xlu0 %1051
  %1053 = vrot.lane.b32.xlu0 %v950, 96
  %v1054 = vpop.permute.xlu0 %1053
  %1055 = vrot.lane.b32.xlu0 %v952, 96
  %v1056 = vpop.permute.xlu0 %1055
  %v1065 = vsel %vm872, %v890, %v978
  %v1066 = vsel %vm872, %v892, %v980
  %v1067 = vsel %vm872, %v894, %v982
  %v1068 = vsel %vm872, %v896, %v984
  %v1069 = vsel %vm872, %v898, %v986
  %v1070 = vsel %vm872, %v900, %v988
  %v1071 = vsel %vm872, %v902, %v990
  %v1072 = vsel %vm872, %v904, %v992
  %vm1073 = vcmask 523264
  %v1074 = vsel %vm1073, %v1065, %v1010
  %v1075 = vsel %vm1073, %v1066, %v1012
  %v1076 = vsel %vm1073, %v1067, %v1014
  %v1077 = vsel %vm1073, %v1068, %v1016
  %v1078 = vsel %vm1073, %v1069, %v1018
  %v1079 = vsel %vm1073, %v1070, %v1020
  %v1080 = vsel %vm1073, %v1071, %v1022
  %v1081 = vsel %vm1073, %v1072, %v1024
  %v1082 = vsel %vm511, %v1074, %v1042
  %v1083 = vsel %vm511, %v1075, %v1044
  %v1084 = vsel %vm511, %v1076, %v1046
  %v1085 = vsel %vm511, %v1077, %v1048
  %v1086 = vsel %vm511, %v1078, %v1050
  %v1087 = vsel %vm511, %v1079, %v1052
  %v1088 = vsel %vm511, %v1080, %v1054
  %v1089 = vsel %vm511, %v1081, %v1056
  %v1090 = vld [vmem:[%s2] sm:$0xff]
  %v1091 = vld [vmem:[%s2 + $0x8] sm:$0xff]
  %v1092 = vld [vmem:[%s2 + $0x10] sm:$0xff]
  %v1093 = vld [vmem:[%s2 + $0x18] sm:$0xff]
  %v1094 = vld [vmem:[%s2 + $0x20] sm:$0xff]
  %v1095 = vld [vmem:[%s2 + $0x28] sm:$0xff]
  %v1096 = vld [vmem:[%s2 + $0x30] sm:$0xff]
  %v1097 = vld [vmem:[%s2 + $0x38] sm:$0xff]
  %v1098 = vld [vmem:[%s2 + $0x40] sm:$0xff]
  %v1099 = vld [vmem:[%s2 + $0x48] sm:$0xff]
  %v1100 = vld [vmem:[%s2 + $0x50] sm:$0xff]
  %v1101 = vld [vmem:[%s2 + $0x58] sm:$0xff]
  %v1102 = vld [vmem:[%s2 + $0x60] sm:$0xff]
  %v1103 = vld [vmem:[%s2 + $0x68] sm:$0xff]
  %v1104 = vld [vmem:[%s2 + $0x70] sm:$0xff]
  %v1105 = vld [vmem:[%s2 + $0x78] sm:$0xff]
  %v1106 = vld [vmem:[%s2 + $0x80] sm:$0xff]
  %v1107 = vld [vmem:[%s2 + $0x88] sm:$0xff]
  %v1108 = vld [vmem:[%s2 + $0x90] sm:$0xff]
  %v1109 = vld [vmem:[%s2 + $0x98] sm:$0xff]
  %v1110 = vld [vmem:[%s5] sm:$0x1]
  %v1112 = vlaneseq
  %v1113 = vshrl.u32 %v1112, 7
  %v1114 = vsub.s32 0, %v1113
  %v1115 = vrot.slane %v1110, %v1114
  %v1118 = vsel %vm872, %v954, 0
  %v1121 = vsel %vm872, %v956, 0
  %v1124 = vsel %vm872, %v958, 0
  %v1127 = vsel %vm872, %v960, 0
  %v1130 = vsel %vm872, %v962, 0
  %v1133 = vsel %vm872, %v964, 0
  %v1136 = vsel %vm872, %v966, 0
  %v1139 = vsel %vm872, %v968, 0
  %1141 = vmatprep.subr.mxu0 0.0
  %1142 = vmatpush1.msra.mxu0 %v1090
  %1143 = vmatprep.subr.mxu0 0.0
  %1144 = vmatpush1.msra.mxu0 %v1091
  %1145 = vmatprep.subr.mxu0 0.0
  %1146 = vmatpush1.msra.mxu0 %v1092
  %1147 = vmatprep.subr.mxu0 0.0
  %1148 = vmatpush1.msra.mxu0 %v1093
  %1149 = vmatprep.subr.mxu0 0.0
  %1150 = vmatpush1.msra.mxu0 %v1094
  %1151 = vmatprep.subr.mxu0 0.0
  %1152 = vmatpush1.msra.mxu0 %v1095
  %1153 = vmatprep.subr.mxu0 0.0
  %1154 = vmatpush1.msra.mxu0 %v1096
  %1155 = vmatprep.subr.mxu0 0.0
  %1156 = vmatpush1.msra.mxu0 %v1097
  %1157 = vmatprep.subr.mxu0 0.0
  %1158 = vmatpush1.msra.mxu0 %v1098
  %1159 = vmatprep.subr.mxu0 0.0
  %1160 = vmatpush1.msra.mxu0 %v1099
  %1161 = vmatprep.subr.mxu0 0.0
  %1162 = vmatpush1.msra.mxu0 %v1100
  %1163 = vmatprep.subr.mxu0 0.0
  %1164 = vmatpush1.msra.mxu0 %v1101
  %1165 = vmatprep.subr.mxu0 0.0
  %1166 = vmatpush1.msra.mxu0 %v1102
  %1167 = vmatprep.subr.mxu0 0.0
  %1168 = vmatpush1.msra.mxu0 %v1103
  %1169 = vmatprep.subr.mxu0 0.0
  %1170 = vmatpush1.msra.mxu0 %v1104
  %1171 = vmatprep.subr.mxu0 0.0
  %1172 = vmatpush1.msra.mxu0 %v1105
  %1173 = vmatprep.subr.mxu0 0.0
  %1174 = vmatpush1.msra.mxu0 %v1106
  %1175 = vmatprep.subr.mxu0 0.0
  %1176 = vmatpush1.msra.mxu0 %v1107
  %1177 = vmatprep.subr.mxu0 0.0
  %1178 = vmatpush1.msra.mxu0 %v1108
  %1179 = vmatprep.subr.mxu0 0.0
  %1180 = vmatpush1.msra.mxu0 %v1109
  %1181 = vmatprep.subr.mxu0 0.0
  %1182 = vmatpush1.msra.mxu0 0.0
  %1183 = vmatprep.subr.mxu0 0.0
  %1184 = vmatpush1.msra.mxu0 0.0
  %1185 = vmatprep.subr.mxu0 0.0
  %1186 = vmatpush1.msra.mxu0 0.0
  %1187 = vmatprep.subr.mxu0 0.0
  %1188 = vmatpush1.msra.mxu0 0.0
  %1189 = vmatprep.subr.mxu0 0.0
  %1190 = vmatpush1.msra.mxu0 0.0
  %1191 = vmatprep.subr.mxu0 0.0
  %1192 = vmatpush1.msra.mxu0 0.0
  %1193 = vmatprep.subr.mxu0 0.0
  %1194 = vmatpush1.msra.mxu0 0.0
  %1195 = vmatprep.subr.mxu0 0.0
  %1196 = vmatpush1.msra.mxu0 0.0
  %1197 = vmatprep.subr.mxu0 0.0
  %1198 = vmatpush1.msra.mxu0 0.0
  %1199 = vmatprep.subr.mxu0 0.0
  %1200 = vmatpush1.msra.mxu0 0.0
  %1201 = vmatprep.subr.mxu0 0.0
  %1202 = vmatpush1.msra.mxu0 0.0
  %1203 = vmatprep.subr.mxu0 0.0
  %1204 = vmatpush1.msra.mxu0 0.0
  %1205 = vmatprep.mubr.f32.mxu0 %v1118
  %1206 = vmatmul.mubr.f32.gmra.mrb[0].mxu0 %v1082
  %v1207 = vpop.f32.mrb[0].mxu0
  %v1208 = vadd.f32 %v1115, %v1207
  %v1209 = vpop.f32.mrb[0].mxu0
  %1210 = vmatprep.mubr.f32.mxu0 %v1121
  %1211 = vmatmul.mubr.f32.gmra.mrb[0].mxu0 %v1083
  %v1212 = vpop.f32.mrb[0].mxu0
  %v1213 = vadd.f32 %v1115, %v1212
  %v1214 = vpop.f32.mrb[0].mxu0
  %1215 = vmatprep.mubr.f32.mxu0 %v1124
  %1216 = vmatmul.mubr.f32.gmra.mrb[0].mxu0 %v1084
  %v1217 = vpop.f32.mrb[0].mxu0
  %v1218 = vadd.f32 %v1115, %v1217
  %v1219 = vpop.f32.mrb[0].mxu0
  %1220 = vmatprep.mubr.f32.mxu0 %v1127
  %1221 = vmatmul.mubr.f32.gmra.mrb[0].mxu0 %v1085
  %v1222 = vpop.f32.mrb[0].mxu0
  %v1223 = vadd.f32 %v1115, %v1222
  %v1224 = vpop.f32.mrb[0].mxu0
  %1225 = vmatprep.mubr.f32.mxu0 %v1130
  %1226 = vmatmul.mubr.f32.gmra.mrb[0].mxu0 %v1086
  %v1227 = vpop.f32.mrb[0].mxu0
  %v1228 = vadd.f32 %v1115, %v1227
  %v1229 = vpop.f32.mrb[0].mxu0
  %1230 = vmatprep.mubr.f32.mxu0 %v1133
  %1231 = vmatmul.mubr.f32.gmra.mrb[0].mxu0 %v1087
  %v1232 = vpop.f32.mrb[0].mxu0
  %v1233 = vadd.f32 %v1115, %v1232
  %v1234 = vpop.f32.mrb[0].mxu0
  %1235 = vmatprep.mubr.f32.mxu0 %v1136
  %1236 = vmatmul.mubr.f32.gmra.mrb[0].mxu0 %v1088
  %v1237 = vpop.f32.mrb[0].mxu0
  %v1238 = vadd.f32 %v1115, %v1237
  %v1239 = vpop.f32.mrb[0].mxu0
  %1240 = vmatprep.mubr.f32.mxu0 %v1139
  %1241 = vmatmul.mubr.f32.gmra.mrb[0].mxu0 %v1089
  %v1242 = vpop.f32.mrb[0].mxu0
  %v1243 = vadd.f32 %v1115, %v1242
  %v1244 = vpop.f32.mrb[0].mxu0
  %1245 = vdwg.mxu0
  %v1246 = vmax.f32 %v1208, 0.0
  %v1247 = vmax.f32 %v1213, 0.0
  %v1248 = vmax.f32 %v1218, 0.0
  %v1249 = vmax.f32 %v1223, 0.0
  %v1250 = vmax.f32 %v1228, 0.0
  %v1251 = vmax.f32 %v1233, 0.0
  %v1252 = vmax.f32 %v1238, 0.0
  %v1253 = vmax.f32 %v1243, 0.0
  %v1254 = vld [vmem:[%s11] sm:$0xff]
  %v1255 = vld [vmem:[%s11 + $0x8] sm:$0xff]
  %v1256 = vld [vmem:[%s11 + $0x10] sm:$0xff]
  %v1257 = vld [vmem:[%s11 + $0x18] sm:$0xff]
  %v1258 = vld [vmem:[%s11 + $0x20] sm:$0xff]
  %v1259 = vld [vmem:[%s11 + $0x28] sm:$0xff]
  %v1260 = vld [vmem:[%s11 + $0x30] sm:$0xff]
  %v1261 = vld [vmem:[%s11 + $0x38] sm:$0x3f]
  %1263 = vset.pattern.permute.xlu0 0
  %1264 = vperm.xlu0 %1263, %v1254
  %v1265 = vpop.permute.xlu0 %1264
  %1268 = vset.pattern.permute.xlu0 0
  %1269 = vperm.xlu0 %1268, %v1255
  %v1270 = vpop.permute.xlu0 %1269
  %1273 = vset.pattern.permute.xlu0 0
  %1274 = vperm.xlu0 %1273, %v1256
  %v1275 = vpop.permute.xlu0 %1274
  %1278 = vset.pattern.permute.xlu0 0
  %1279 = vperm.xlu0 %1278, %v1257
  %v1280 = vpop.permute.xlu0 %1279
  %1283 = vset.pattern.permute.xlu0 0
  %1284 = vperm.xlu0 %1283, %v1258
  %v1285 = vpop.permute.xlu0 %1284
  %1288 = vset.pattern.permute.xlu0 0
  %1289 = vperm.xlu0 %1288, %v1259
  %v1290 = vpop.permute.xlu0 %1289
  %1293 = vset.pattern.permute.xlu0 0
  %1294 = vperm.xlu0 %1293, %v1260
  %v1295 = vpop.permute.xlu0 %1294
  %1298 = vset.pattern.permute.xlu0 0
  %1299 = vperm.xlu0 %1298, %v1261
  %v1300 = vpop.permute.xlu0 %1299
  %v1302 = vmul.f32 %v1246, %v1265
  %v1303 = vmul.f32 %v1247, %v1270
  %v1304 = vmul.f32 %v1248, %v1275
  %v1305 = vmul.f32 %v1249, %v1280
  %v1306 = vmul.f32 %v1250, %v1285
  %v1307 = vmul.f32 %v1251, %v1290
  %v1308 = vmul.f32 %v1252, %v1295
  %v1309 = vmul.f32 %v1253, %v1300
  %1310 = vst.msk [vmem:[#allocation3 + $0x2] sm:$0xff] %vm1073, %v1302
  %1311 = vst.msk [vmem:[#allocation3 + $0xa] sm:$0xff] %vm1073, %v1303
  %1312 = vst.msk [vmem:[#allocation3 + $0x12] sm:$0xff] %vm1073, %v1304
  %1313 = vst.msk [vmem:[#allocation3 + $0x1a] sm:$0xff] %vm1073, %v1305
  %1314 = vst.msk [vmem:[#allocation3 + $0x22] sm:$0xff] %vm1073, %v1306
  %1315 = vst.msk [vmem:[#allocation3 + $0x2a] sm:$0xff] %vm1073, %v1307
  %1316 = vst.msk [vmem:[#allocation3 + $0x32] sm:$0xff] %vm1073, %v1308
  %vm1317 = vcmask 521216
  %1318 = vst.msk [vmem:[#allocation3 + $0x3a] sm:$0x3f] %vm1317, %v1309
  %v1319 = vld [vmem:[#allocation3] ss:$2 sm:$0xff]
  %s1320 = scalar_lea.vmem [#allocation3], 16
  %v1321 = vld [vmem:[%s1320] ss:$2 sm:$0xff]
  %s1322 = scalar_lea.vmem [#allocation3], 32
  %v1323 = vld [vmem:[%s1322] ss:$2 sm:$0xff]
  %s1324 = scalar_lea.vmem [#allocation3], 48
  %v1325 = vld [vmem:[%s1324] ss:$2 sm:$0x3f]
  %s1326 = scalar_lea.vmem [#allocation3], 1
  %v1327 = vld [vmem:[%s1326] ss:$2 sm:$0xff]
  %s1328 = scalar_lea.vmem [#allocation3], 17
  %v1329 = vld [vmem:[%s1328] ss:$2 sm:$0xff]
  %s1330 = scalar_lea.vmem [#allocation3], 33
  %v1331 = vld [vmem:[%s1330] ss:$2 sm:$0xff]
  %s1332 = scalar_lea.vmem [#allocation3], 49
  %v1333 = vld [vmem:[%s1332] ss:$2 sm:$0x3f]
  %s1334 = scalar_lea.vmem [#allocation3], 2
  %v1335 = vld [vmem:[%s1334] ss:$2 sm:$0xff]
  %s1336 = scalar_lea.vmem [#allocation3], 18
  %v1337 = vld [vmem:[%s1336] ss:$2 sm:$0xff]
  %s1338 = scalar_lea.vmem [#allocation3], 34
  %v1339 = vld [vmem:[%s1338] ss:$2 sm:$0xff]
  %s1340 = scalar_lea.vmem [#allocation3], 50
  %v1341 = vld [vmem:[%s1340] ss:$2 sm:$0x3f]
  %s1342 = scalar_lea.vmem [#allocation3], 3
  %v1343 = vld [vmem:[%s1342] ss:$2 sm:$0xff]
  %s1344 = scalar_lea.vmem [#allocation3], 19
  %v1345 = vld [vmem:[%s1344] ss:$2 sm:$0xff]
  %s1346 = scalar_lea.vmem [#allocation3], 35
  %v1347 = vld [vmem:[%s1346] ss:$2 sm:$0xff]
  %s1348 = scalar_lea.vmem [#allocation3], 51
  %v1349 = vld [vmem:[%s1348] ss:$2 sm:$0x3f]
  %s1350 = scalar_lea.vmem [#allocation3], 4
  %v1351 = vld [vmem:[%s1350] ss:$2 sm:$0xff]
  %s1352 = scalar_lea.vmem [#allocation3], 20
  %v1353 = vld [vmem:[%s1352] ss:$2 sm:$0xff]
  %s1354 = scalar_lea.vmem [#allocation3], 36
  %v1355 = vld [vmem:[%s1354] ss:$2 sm:$0xff]
  %s1356 = scalar_lea.vmem [#allocation3], 52
  %v1357 = vld [vmem:[%s1356] ss:$2 sm:$0x3f]
  %1362 = vrot.lane.b32.xlu0 %v1327, 64
  %v1363 = vpop.permute.xlu0 %1362
  %1364 = vrot.lane.b32.xlu0 %v1329, 64
  %v1365 = vpop.permute.xlu0 %1364
  %1366 = vrot.lane.b32.xlu0 %v1331, 64
  %v1367 = vpop.permute.xlu0 %1366
  %1368 = vrot.lane.b32.xlu0 %v1333, 64
  %v1369 = vpop.permute.xlu0 %1368
  %1378 = vrot.lane.b32.xlu0 %v1343, 64
  %v1379 = vpop.permute.xlu0 %1378
  %1380 = vrot.lane.b32.xlu0 %v1345, 64
  %v1381 = vpop.permute.xlu0 %1380
  %1382 = vrot.lane.b32.xlu0 %v1347, 64
  %v1383 = vpop.permute.xlu0 %1382
  %1384 = vrot.lane.b32.xlu0 %v1349, 64
  %v1385 = vpop.permute.xlu0 %1384
  %v1390 = vsel %vm1073, %v1319, %v1363
  %v1391 = vsel %vm1073, %v1321, %v1365
  %v1392 = vsel %vm1073, %v1323, %v1367
  %v1393 = vsel %vm1073, %v1325, %v1369
  %v1394 = vsel %vm1073, %v1335, %v1379
  %v1395 = vsel %vm1073, %v1337, %v1381
  %v1396 = vsel %vm1073, %v1339, %v1383
  %v1397 = vsel %vm1073, %v1341, %v1385
  %v1398 = vld [vmem:[%s3] sm:$0xff]
  %v1399 = vld [vmem:[%s3 + $0x8] sm:$0xff]
  %v1400 = vld [vmem:[%s3 + $0x10] sm:$0xff]
  %v1401 = vld [vmem:[%s3 + $0x18] sm:$0xff]
  %v1402 = vld [vmem:[%s3 + $0x20] sm:$0xff]
  %v1403 = vld [vmem:[%s3 + $0x28] sm:$0xff]
  %v1404 = vld [vmem:[%s3 + $0x30] sm:$0xff]
  %v1405 = vld [vmem:[%s3 + $0x38] sm:$0xff]
  %v1406 = vld [vmem:[%s3 + $0x40] sm:$0xff]
  %v1407 = vld [vmem:[%s3 + $0x48] sm:$0xff]
  %v1408 = vld [vmem:[%s3 + $0x50] sm:$0xff]
  %v1409 = vld [vmem:[%s3 + $0x58] sm:$0xff]
  %v1410 = vld [vmem:[%s3 + $0x60] sm:$0xff]
  %v1411 = vld [vmem:[%s3 + $0x68] sm:$0xff]
  %v1412 = vld [vmem:[%s3 + $0x70] sm:$0xff]
  %v1413 = vld [vmem:[%s3 + $0x78] sm:$0xff]
  %v1414 = vld [vmem:[%s3 + $0x80] sm:$0xff]
  %v1415 = vld [vmem:[%s3 + $0x88] sm:$0xff]
  %v1416 = vld [vmem:[%s3 + $0x90] sm:$0xff]
  %v1417 = vld [vmem:[%s3 + $0x98] sm:$0xff]
  %v1418 = vld [vmem:[%s3 + $0xa0] sm:$0xff]
  %v1419 = vld [vmem:[%s3 + $0xa8] sm:$0xff]
  %v1420 = vld [vmem:[%s3 + $0xb0] sm:$0xff]
  %v1421 = vld [vmem:[%s3 + $0xb8] sm:$0xff]
  %v1422 = vld [vmem:[%s3 + $0xc0] sm:$0xff]
  %v1423 = vld [vmem:[%s3 + $0xc8] sm:$0xff]
  %v1424 = vld [vmem:[%s3 + $0xd0] sm:$0xff]
  %v1425 = vld [vmem:[%s3 + $0xd8] sm:$0xff]
  %v1426 = vld [vmem:[%s3 + $0xe0] sm:$0xff]
  %v1427 = vld [vmem:[%s3 + $0xe8] sm:$0xff]
  %v1428 = vld [vmem:[%s3 + $0xf0] sm:$0xff]
  %v1429 = vld [vmem:[%s3 + $0xf8] sm:$0xff]
  %v1430 = vld [vmem:[%s3 + $0x100] sm:$0xff]
  %v1431 = vld [vmem:[%s3 + $0x108] sm:$0xff]
  %v1432 = vld [vmem:[%s3 + $0x110] sm:$0xff]
  %v1433 = vld [vmem:[%s3 + $0x118] sm:$0xff]
  %v1434 = vld [vmem:[%s3 + $0x120] sm:$0xff]
  %v1435 = vld [vmem:[%s3 + $0x128] sm:$0xff]
  %v1436 = vld [vmem:[%s3 + $0x130] sm:$0xff]
  %v1437 = vld [vmem:[%s3 + $0x138] sm:$0xff]
  %v1438 = vld [vmem:[%s6] sm:$0x1]
  %v1440 = vlaneseq
  %v1441 = vshrl.u32 %v1440, 7
  %v1442 = vsub.s32 0, %v1441
  %v1443 = vrot.slane %v1438, %v1442
  %v1446 = vsel %vm1073, %v1351, 0
  %v1449 = vsel %vm1073, %v1353, 0
  %v1452 = vsel %vm1073, %v1355, 0
  %v1455 = vsel %vm1073, %v1357, 0
  %1457 = vmatprep.subr.mxu0 0.0
  %1458 = vmatpush1.msra.mxu0 %v1398
  %1459 = vmatprep.subr.mxu0 0.0
  %1460 = vmatpush1.msra.mxu0 %v1399
  %1461 = vmatprep.subr.mxu0 0.0
  %1462 = vmatpush1.msra.mxu0 %v1400
  %1463 = vmatprep.subr.mxu0 0.0
  %1464 = vmatpush1.msra.mxu0 %v1401
  %1465 = vmatprep.subr.mxu0 0.0
  %1466 = vmatpush1.msra.mxu0 %v1402
  %1467 = vmatprep.subr.mxu0 0.0
  %1468 = vmatpush1.msra.mxu0 %v1403
  %1469 = vmatprep.subr.mxu0 0.0
  %1470 = vmatpush1.msra.mxu0 %v1404
  %1471 = vmatprep.subr.mxu0 0.0
  %1472 = vmatpush1.msra.mxu0 %v1405
  %1473 = vmatprep.subr.mxu0 0.0
  %1474 = vmatpush1.msra.mxu0 %v1406
  %1475 = vmatprep.subr.mxu0 0.0
  %1476 = vmatpush1.msra.mxu0 %v1407
  %1477 = vmatprep.subr.mxu0 0.0
  %1478 = vmatpush1.msra.mxu0 %v1408
  %1479 = vmatprep.subr.mxu0 0.0
  %1480 = vmatpush1.msra.mxu0 %v1409
  %1481 = vmatprep.subr.mxu0 0.0
  %1482 = vmatpush1.msra.mxu0 %v1410
  %1483 = vmatprep.subr.mxu0 0.0
  %1484 = vmatpush1.msra.mxu0 %v1411
  %1485 = vmatprep.subr.mxu0 0.0
  %1486 = vmatpush1.msra.mxu0 %v1412
  %1487 = vmatprep.subr.mxu0 0.0
  %1488 = vmatpush1.msra.mxu0 %v1413
  %1489 = vmatprep.subr.mxu0 0.0
  %1490 = vmatpush1.msra.mxu0 %v1414
  %1491 = vmatprep.subr.mxu0 0.0
  %1492 = vmatpush1.msra.mxu0 %v1415
  %1493 = vmatprep.subr.mxu0 0.0
  %1494 = vmatpush1.msra.mxu0 %v1416
  %1495 = vmatprep.subr.mxu0 0.0
  %1496 = vmatpush1.msra.mxu0 %v1417
  %1497 = vmatprep.subr.mxu0 0.0
  %1498 = vmatpush1.msra.mxu0 %v1418
  %1499 = vmatprep.subr.mxu0 0.0
  %1500 = vmatpush1.msra.mxu0 %v1419
  %1501 = vmatprep.subr.mxu0 0.0
  %1502 = vmatpush1.msra.mxu0 %v1420
  %1503 = vmatprep.subr.mxu0 0.0
  %1504 = vmatpush1.msra.mxu0 %v1421
  %1505 = vmatprep.subr.mxu0 0.0
  %1506 = vmatpush1.msra.mxu0 %v1422
  %1507 = vmatprep.subr.mxu0 0.0
  %1508 = vmatpush1.msra.mxu0 %v1423
  %1509 = vmatprep.subr.mxu0 0.0
  %1510 = vmatpush1.msra.mxu0 %v1424
  %1511 = vmatprep.subr.mxu0 0.0
  %1512 = vmatpush1.msra.mxu0 %v1425
  %1513 = vmatprep.subr.mxu0 0.0
  %1514 = vmatpush1.msra.mxu0 %v1426
  %1515 = vmatprep.subr.mxu0 0.0
  %1516 = vmatpush1.msra.mxu0 %v1427
  %1517 = vmatprep.subr.mxu0 0.0
  %1518 = vmatpush1.msra.mxu0 %v1428
  %1519 = vmatprep.subr.mxu0 0.0
  %1520 = vmatpush1.msra.mxu0 %v1429
  %1521 = vmatprep.mubr.f32.mxu0 %v1394
  %1522 = vmatmul.mubr.f32.gmra.mrb[0].mxu0 %v1390
  %v1523 = vpop.f32.mrb[0].mxu0
  %v1524 = vadd.f32 %v1443, %v1523
  %v1525 = vpop.f32.mrb[0].mxu0
  %1526 = vmatprep.mubr.f32.mxu0 %v1395
  %1527 = vmatmul.mubr.f32.gmra.mrb[0].mxu0 %v1391
  %v1528 = vpop.f32.mrb[0].mxu0
  %v1529 = vadd.f32 %v1443, %v1528
  %v1530 = vpop.f32.mrb[0].mxu0
  %1531 = vmatprep.mubr.f32.mxu0 %v1396
  %1532 = vmatmul.mubr.f32.gmra.mrb[0].mxu0 %v1392
  %v1533 = vpop.f32.mrb[0].mxu0
  %v1534 = vadd.f32 %v1443, %v1533
  %v1535 = vpop.f32.mrb[0].mxu0
  %1536 = vmatprep.mubr.f32.mxu0 %v1397
  %1537 = vmatmul.mubr.f32.gmra.mrb[0].mxu0 %v1393
  %v1538 = vpop.f32.mrb[0].mxu0
  %v1539 = vadd.f32 %v1443, %v1538
  %v1540 = vpop.f32.mrb[0].mxu0
  %1541 = vdwg.mxu0
  %1542 = vmatprep.subr.mxu0 0.0
  %1543 = vmatpush1.msra.mxu0 %v1430
  %1544 = vmatprep.subr.mxu0 0.0
  %1545 = vmatpush1.msra.mxu0 %v1431
  %1546 = vmatprep.subr.mxu0 0.0
  %1547 = vmatpush1.msra.mxu0 %v1432
  %1548 = vmatprep.subr.mxu0 0.0
  %1549 = vmatpush1.msra.mxu0 %v1433
  %1550 = vmatprep.subr.mxu0 0.0
  %1551 = vmatpush1.msra.mxu0 %v1434
  %1552 = vmatprep.subr.mxu0 0.0
  %1553 = vmatpush1.msra.mxu0 %v1435
  %1554 = vmatprep.subr.mxu0 0.0
  %1555 = vmatpush1.msra.mxu0 %v1436
  %1556 = vmatprep.subr.mxu0 0.0
  %1557 = vmatpush1.msra.mxu0 %v1437
  %1558 = vmatprep.subr.mxu0 0.0
  %1559 = vmatpush1.msra.mxu0 0.0
  %1560 = vmatprep.subr.mxu0 0.0
  %1561 = vmatpush1.msra.mxu0 0.0
  %1562 = vmatprep.subr.mxu0 0.0
  %1563 = vmatpush1.msra.mxu0 0.0
  %1564 = vmatprep.subr.mxu0 0.0
  %1565 = vmatpush1.msra.mxu0 0.0
  %1566 = vmatprep.subr.mxu0 0.0
  %1567 = vmatpush1.msra.mxu0 0.0
  %1568 = vmatprep.subr.mxu0 0.0
  %1569 = vmatpush1.msra.mxu0 0.0
  %1570 = vmatprep.subr.mxu0 0.0
  %1571 = vmatpush1.msra.mxu0 0.0
  %1572 = vmatprep.subr.mxu0 0.0
  %1573 = vmatpush1.msra.mxu0 0.0
  %1574 = vmatprep.subr.mxu0 0.0
  %1575 = vmatpush1.msra.mxu0 0.0
  %1576 = vmatprep.subr.mxu0 0.0
  %1577 = vmatpush1.msra.mxu0 0.0
  %1578 = vmatprep.subr.mxu0 0.0
  %1579 = vmatpush1.msra.mxu0 0.0
  %1580 = vmatprep.subr.mxu0 0.0
  %1581 = vmatpush1.msra.mxu0 0.0
  %1582 = vmatprep.subr.mxu0 0.0
  %1583 = vmatpush1.msra.mxu0 0.0
  %1584 = vmatprep.subr.mxu0 0.0
  %1585 = vmatpush1.msra.mxu0 0.0
  %1586 = vmatprep.subr.mxu0 0.0
  %1587 = vmatpush1.msra.mxu0 0.0
  %1588 = vmatprep.subr.mxu0 0.0
  %1589 = vmatpush1.msra.mxu0 0.0
  %1590 = vmatprep.subr.mxu0 0.0
  %1591 = vmatpush1.msra.mxu0 0.0
  %1592 = vmatprep.subr.mxu0 0.0
  %1593 = vmatpush1.msra.mxu0 0.0
  %1594 = vmatprep.subr.mxu0 0.0
  %1595 = vmatpush1.msra.mxu0 0.0
  %1596 = vmatprep.subr.mxu0 0.0
  %1597 = vmatpush1.msra.mxu0 0.0
  %1598 = vmatprep.subr.mxu0 0.0
  %1599 = vmatpush1.msra.mxu0 0.0
  %1600 = vmatprep.subr.mxu0 0.0
  %1601 = vmatpush1.msra.mxu0 0.0
  %1602 = vmatprep.subr.mxu0 0.0
  %1603 = vmatpush1.msra.mxu0 0.0
  %1604 = vmatprep.subr.mxu0 0.0
  %1605 = vmatpush1.msra.mxu0 0.0
  %1606 = vmatprep.mubr.f32.mxu0 0.0
  %1607 = vmatmul.mubr.f32.gmra.mrb[0].mxu0 %v1446
  %v1608 = vpop.f32.mrb[0].mxu0
  %v1609 = vadd.f32 %v1524, %v1608
  %v1610 = vpop.f32.mrb[0].mxu0
  %1611 = vmatprep.mubr.f32.mxu0 0.0
  %1612 = vmatmul.mubr.f32.gmra.mrb[0].mxu0 %v1449
  %v1613 = vpop.f32.mrb[0].mxu0
  %v1614 = vadd.f32 %v1529, %v1613
  %v1615 = vpop.f32.mrb[0].mxu0
  %1616 = vmatprep.mubr.f32.mxu0 0.0
  %1617 = vmatmul.mubr.f32.gmra.mrb[0].mxu0 %v1452
  %v1618 = vpop.f32.mrb[0].mxu0
  %v1619 = vadd.f32 %v1534, %v1618
  %v1620 = vpop.f32.mrb[0].mxu0
  %1621 = vmatprep.mubr.f32.mxu0 0.0
  %1622 = vmatmul.mubr.f32.gmra.mrb[0].mxu0 %v1455
  %v1623 = vpop.f32.mrb[0].mxu0
  %v1624 = vadd.f32 %v1539, %v1623
  %v1625 = vpop.f32.mrb[0].mxu0
  %1626 = vdwg.mxu0
  %v1627 = vmax.f32 %v1609, 0.0
  %v1628 = vmax.f32 %v1614, 0.0
  %v1629 = vmax.f32 %v1619, 0.0
  %v1630 = vmax.f32 %v1624, 0.0
  %v1631 = vld [vmem:[%s9] sm:$0xff]
  %vm1632 = vcmask 244736
  %v1634 = vsel %vm1632, %v1631, 0
  %vm1636 = vcmask 1045504
  %v1638 = vsel %vm1636, %v1630, 0
  %1640 = vmatprep.subr.mxu0 0.0
  %1641 = vmatpush1.msra.mxu0 %v1627
  %1642 = vmatprep.subr.mxu0 0.0
  %1643 = vmatpush1.msra.mxu0 %v1628
  %1644 = vmatprep.subr.mxu0 0.0
  %1645 = vmatpush1.msra.mxu0 %v1629
  %1646 = vmatprep.subr.mxu0 0.0
  %1647 = vmatpush1.msra.mxu0 %v1638
  %1648 = vmatprep.subr.mxu0 0.0
  %1649 = vmatpush1.msra.mxu0 0.0
  %1650 = vmatprep.subr.mxu0 0.0
  %1651 = vmatpush1.msra.mxu0 0.0
  %1652 = vmatprep.subr.mxu0 0.0
  %1653 = vmatpush1.msra.mxu0 0.0
  %1654 = vmatprep.subr.mxu0 0.0
  %1655 = vmatpush1.msra.mxu0 0.0
  %1656 = vmatprep.subr.mxu0 0.0
  %1657 = vmatpush1.msra.mxu0 0.0
  %1658 = vmatprep.subr.mxu0 0.0
  %1659 = vmatpush1.msra.mxu0 0.0
  %1660 = vmatprep.subr.mxu0 0.0
  %1661 = vmatpush1.msra.mxu0 0.0
  %1662 = vmatprep.subr.mxu0 0.0
  %1663 = vmatpush1.msra.mxu0 0.0
  %1664 = vmatprep.subr.mxu0 0.0
  %1665 = vmatpush1.msra.mxu0 0.0
  %1666 = vmatprep.subr.mxu0 0.0
  %1667 = vmatpush1.msra.mxu0 0.0
  %1668 = vmatprep.subr.mxu0 0.0
  %1669 = vmatpush1.msra.mxu0 0.0
  %1670 = vmatprep.subr.mxu0 0.0
  %1671 = vmatpush1.msra.mxu0 0.0
  %1672 = vmatprep.subr.mxu0 0.0
  %1673 = vmatpush1.msra.mxu0 0.0
  %1674 = vmatprep.subr.mxu0 0.0
  %1675 = vmatpush1.msra.mxu0 0.0
  %1676 = vmatprep.subr.mxu0 0.0
  %1677 = vmatpush1.msra.mxu0 0.0
  %1678 = vmatprep.subr.mxu0 0.0
  %1679 = vmatpush1.msra.mxu0 0.0
  %1680 = vmatprep.subr.mxu0 0.0
  %1681 = vmatpush1.msra.mxu0 0.0
  %1682 = vmatprep.subr.mxu0 0.0
  %1683 = vmatpush1.msra.mxu0 0.0
  %1684 = vmatprep.subr.mxu0 0.0
  %1685 = vmatpush1.msra.mxu0 0.0
  %1686 = vmatprep.subr.mxu0 0.0
  %1687 = vmatpush1.msra.mxu0 0.0
  %1688 = vmatprep.subr.mxu0 0.0
  %1689 = vmatpush1.msra.mxu0 0.0
  %1690 = vmatprep.subr.mxu0 0.0
  %1691 = vmatpush1.msra.mxu0 0.0
  %1692 = vmatprep.subr.mxu0 0.0
  %1693 = vmatpush1.msra.mxu0 0.0
  %1694 = vmatprep.subr.mxu0 0.0
  %1695 = vmatpush1.msra.mxu0 0.0
  %1696 = vmatprep.subr.mxu0 0.0
  %1697 = vmatpush1.msra.mxu0 0.0
  %1698 = vmatprep.subr.mxu0 0.0
  %1699 = vmatpush1.msra.mxu0 0.0
  %1700 = vmatprep.subr.mxu0 0.0
  %1701 = vmatpush1.msra.mxu0 0.0
  %1702 = vmatprep.subr.mxu0 0.0
  %1703 = vmatpush1.msra.mxu0 0.0
  %1704 = vmatprep.mubr.f32.mxu0 0.0
  %1705 = vmatmul.mubr.f32.gmra.mrb[0].mxu0 %v1634
  %v1706 = vpop.f32.mrb[0].mxu0
  %v1707 = vadd.f32 0.0, %v1706
  %v1708 = vpop.f32.mrb[0].mxu0
  %1709 = vdwg.mxu0
  %v1710 = vld [vmem:[%s7] sm:$0xff]
  %v1711 = vld [vmem:[%s7 + $0x8] sm:$0xff]
  %v1712 = vld [vmem:[%s7 + $0x10] sm:$0xff]
  %v1713 = vld [vmem:[%s7 + $0x18] sm:$0xff]
  %v1714 = vld [vmem:[%s7 + $0x20] sm:$0xff]
  %v1715 = vld [vmem:[%s7 + $0x28] sm:$0xff]
  %v1716 = vld [vmem:[%s7 + $0x30] sm:$0xff]
  %v1717 = vld [vmem:[%s7 + $0x38] sm:$0xff]
  %v1718 = vld [vmem:[%s7 + $0x40] sm:$0xff]
  %v1719 = vld [vmem:[%s7 + $0x48] sm:$0xff]
  %v1720 = vld [vmem:[%s7 + $0x50] sm:$0xff]
  %v1721 = vld [vmem:[%s7 + $0x58] sm:$0xff]
  %v1722 = vld [vmem:[%s7 + $0x60] sm:$0xff]
  %v1723 = vld [vmem:[%s7 + $0x68] sm:$0xff]
  %v1724 = vld [vmem:[%s7 + $0x70] sm:$0xff]
  %v1725 = vld [vmem:[%s7 + $0x78] sm:$0xff]
  %v1726 = vld [vmem:[%s8] sm:$0x1]
  %v1728 = vlaneseq
  %v1729 = vshrl.u32 %v1728, 7
  %v1730 = vsub.s32 0, %v1729
  %v1731 = vrot.slane %v1726, %v1730
  %1733 = vmatprep.subr.mxu0 0.0
  %1734 = vmatpush1.msra.mxu0 %v1710
  %1735 = vmatprep.subr.mxu0 0.0
  %1736 = vmatpush1.msra.mxu0 %v1711
  %1737 = vmatprep.subr.mxu0 0.0
  %1738 = vmatpush1.msra.mxu0 %v1712
  %1739 = vmatprep.subr.mxu0 0.0
  %1740 = vmatpush1.msra.mxu0 %v1713
  %1741 = vmatprep.subr.mxu0 0.0
  %1742 = vmatpush1.msra.mxu0 %v1714
  %1743 = vmatprep.subr.mxu0 0.0
  %1744 = vmatpush1.msra.mxu0 %v1715
  %1745 = vmatprep.subr.mxu0 0.0
  %1746 = vmatpush1.msra.mxu0 %v1716
  %1747 = vmatprep.subr.mxu0 0.0
  %1748 = vmatpush1.msra.mxu0 %v1717
  %1749 = vmatprep.subr.mxu0 0.0
  %1750 = vmatpush1.msra.mxu0 %v1718
  %1751 = vmatprep.subr.mxu0 0.0
  %1752 = vmatpush1.msra.mxu0 %v1719
  %1753 = vmatprep.subr.mxu0 0.0
  %1754 = vmatpush1.msra.mxu0 %v1720
  %1755 = vmatprep.subr.mxu0 0.0
  %1756 = vmatpush1.msra.mxu0 %v1721
  %1757 = vmatprep.subr.mxu0 0.0
  %1758 = vmatpush1.msra.mxu0 %v1722
  %1759 = vmatprep.subr.mxu0 0.0
  %1760 = vmatpush1.msra.mxu0 %v1723
  %1761 = vmatprep.subr.mxu0 0.0
  %1762 = vmatpush1.msra.mxu0 %v1724
  %1763 = vmatprep.subr.mxu0 0.0
  %1764 = vmatpush1.msra.mxu0 %v1725
  %1765 = vmatprep.subr.mxu0 0.0
  %1766 = vmatpush1.msra.mxu0 0.0
  %1767 = vmatprep.subr.mxu0 0.0
  %1768 = vmatpush1.msra.mxu0 0.0
  %1769 = vmatprep.subr.mxu0 0.0
  %1770 = vmatpush1.msra.mxu0 0.0
  %1771 = vmatprep.subr.mxu0 0.0
  %1772 = vmatpush1.msra.mxu0 0.0
  %1773 = vmatprep.subr.mxu0 0.0
  %1774 = vmatpush1.msra.mxu0 0.0
  %1775 = vmatprep.subr.mxu0 0.0
  %1776 = vmatpush1.msra.mxu0 0.0
  %1777 = vmatprep.subr.mxu0 0.0
  %1778 = vmatpush1.msra.mxu0 0.0
  %1779 = vmatprep.subr.mxu0 0.0
  %1780 = vmatpush1.msra.mxu0 0.0
  %1781 = vmatprep.subr.mxu0 0.0
  %1782 = vmatpush1.msra.mxu0 0.0
  %1783 = vmatprep.subr.mxu0 0.0
  %1784 = vmatpush1.msra.mxu0 0.0
  %1785 = vmatprep.subr.mxu0 0.0
  %1786 = vmatpush1.msra.mxu0 0.0
  %1787 = vmatprep.subr.mxu0 0.0
  %1788 = vmatpush1.msra.mxu0 0.0
  %1789 = vmatprep.subr.mxu0 0.0
  %1790 = vmatpush1.msra.mxu0 0.0
  %1791 = vmatprep.subr.mxu0 0.0
  %1792 = vmatpush1.msra.mxu0 0.0
  %1793 = vmatprep.subr.mxu0 0.0
  %1794 = vmatpush1.msra.mxu0 0.0
  %1795 = vmatprep.subr.mxu0 0.0
  %1796 = vmatpush1.msra.mxu0 0.0
  %1797 = vmatprep.mubr.f32.mxu0 0.0
  %1798 = vmatmul.mubr.f32.gmra.mrb[0].mxu0 %v1707
  %v1799 = vpop.f32.mrb[0].mxu0
  %v1800 = vadd.f32 %v1731, %v1799
  %v1801 = vpop.f32.mrb[0].mxu0
  %1802 = vdwg.mxu0
  %1803 = vst [vmem:[%s12] sm:$0xff] %v1800
  // Predicated region
  $region50: #{convnet_forward.1} parent=0 // pred_check
    _
  $region51: #{convnet_forward.1} parent=0 // pred_check_branch
    %1805 = sbr.rel (0) target = $region53
  $region52: #{convnet_forward.1} parent=0 // pred_region
    _
  $region53: #{convnet_forward.1} parent=0 // pred_fallthru
    _
  // Predicated region
  $region54: #{convnet_forward.1} parent=0 // pred_check
    _
  $region55: #{convnet_forward.1} parent=0 // pred_check_branch
    %1807 = sbr.rel (0) target = $region57
  $region56: #{convnet_forward.1} parent=0 // pred_region
    _
  $region57: #{convnet_forward.1} parent=0 // pred_fallthru
    _

</llo_original>
